<compile_context>
chip_gen: v7x
topology: tpu7x:2x2x1
jax: 0.10.0
libtpu: 0.0.40
codegen_flags: <defaults>
</compile_context>

<pallas_src>
import itertools

import numpy as np
import jax
import jax.numpy as jnp
from jax import lax
from jax.experimental import pallas as pl
from jax.experimental.pallas import tpu as pltpu

# ----------------------- small, self-consistent configuration -----------------
B = 2
NUM_HEADS = 2
KEY_DIM = 8
ATTN_RATIO = 2
D = ATTN_RATIO * KEY_DIM           # value dim per head ("self.d") = 16
DIM = NUM_HEADS * D                # 32 ; cascade add requires dim//num_heads == d
CG = DIM // NUM_HEADS              # per-head input channels = 16
RES = 8                            # resolution -> H = W = 8
H = W = RES
N = H * W                          # 64 tokens
LANES = B * N                      # 128 -> exactly one full lane width
KS = 5                             # dw-conv kernel size (kernels = [5, 5])
PAD = KS // 2
QKV_OUT = 2 * KEY_DIM + D          # 32
SCALE = KEY_DIM ** -0.5
BN_EPS = 1e-5
NEG_INF = -1e9                     # bias for cross-batch attention blocks


# --------------------------------- Pallas kernel -------------------------------
def cga_kernel(x_ref, wqkv_ref, bqkv_ref, wtap_ref, bdw_ref,
               bias_ref, wproj_ref, bproj_ref, out_ref):
    x = x_ref[...]                                    # (DIM, LANES) f32
    feat = x[0:CG]                                    # head-0 input (CG, LANES)
    outs = []
    for h in range(NUM_HEADS):                        # cascade (static unroll)
        if h > 0:
            feat = feat + x[h * CG:(h + 1) * CG]
        # folded 1x1 conv + BN (qkv projection): bf16 MXU operands, f32 accum
        qkv = jnp.dot(wqkv_ref[h].astype(jnp.bfloat16),
                      feat.astype(jnp.bfloat16),
                      preferred_element_type=jnp.float32) + bqkv_ref[h]
        q = qkv[0:KEY_DIM]                            # (KEY_DIM, LANES)
        k = qkv[KEY_DIM:2 * KEY_DIM]                  # (KEY_DIM, LANES)
        v = qkv[2 * KEY_DIM:]                         # (D, LANES)
        # depthwise KSxKS conv on q: XLU lane-rolls + one VPU FMA per tap.
        # Tap weight * boundary mask * softmax-scale are pre-folded on the
        # host into wtap_ref[h, t] of shape (KEY_DIM, LANES).
        qd = jnp.zeros_like(q)
        for t in range(KS * KS):
            dy, dx = t // KS, t % KS
            off = (dy - PAD) * W + (dx - PAD)         # flat source-token offset
            shifted = q if off == 0 else pltpu.roll(q, shift=(-off) % LANES,
                                                    axis=1)
            qd = qd + wtap_ref[h, t] * shifted
        qd = qd + bdw_ref[h]
        # attention over the folded (LANES, LANES) layout; bias is block-
        # diagonal with -1e9 off-blocks, so cross-batch probabilities are 0.
        attn = lax.dot_general(qd.astype(jnp.bfloat16), k.astype(jnp.bfloat16),
                               (((0,), (0,)), ((), ())),
                               preferred_element_type=jnp.float32)  # (LANES, LANES)
        attn = attn + bias_ref[h]
        attn = attn - jnp.max(attn, axis=-1, keepdims=True)
        attn = jnp.exp(attn)
        attn = attn * pl.reciprocal(jnp.sum(attn, axis=-1, keepdims=True),
                                    approx=True)
        feat = lax.dot_general(v.astype(jnp.bfloat16), attn.astype(jnp.bfloat16),
                               (((1,), (1,)), ((), ())),
                               preferred_element_type=jnp.float32)  # (D, LANES)
        outs.append(feat)
    cat = jnp.concatenate(outs, axis=0)               # (NUM_HEADS*D, LANES)
    act = jnp.maximum(cat, 0.0)                       # ReLU
    out_ref[...] = jnp.dot(wproj_ref[...].astype(jnp.bfloat16),
                           act.astype(jnp.bfloat16),
                           preferred_element_type=jnp.float32) + bproj_ref[...]


@jax.jit
def cascaded_group_attention(x_nchw, p):
    # Fold batch into the 128-wide lane axis: (B, DIM, H, W) -> (DIM, B*N).
    x = x_nchw.reshape(B, DIM, N).transpose(1, 0, 2).reshape(DIM, LANES)
    out = pl.pallas_call(
        cga_kernel,
        # Single invocation, no grid: all operands (<0.5 MiB total) live fully
        # in VMEM, the output is a lane-dense (32, 128) slab (unmasked stores),
        # and there is no per-grid-step / pipelining overhead to pay.
        out_shape=jax.ShapeDtypeStruct((DIM, LANES), jnp.float32),
    )(x, p["w_qkv"], p["b_qkv"], p["w_dw_tap"], p["b_dw_scaled"],
      p["bias_full"], p["w_proj"], p["b_proj"])
    return out.reshape(DIM, B, N).transpose(1, 0, 2).reshape(B, DIM, H, W)


# ------------------------- parameter setup (plain JAX / numpy glue) ------------
def fold_bn(w, gamma, beta, mean, var):
    scale = gamma / jnp.sqrt(var + BN_EPS)
    return w * scale.reshape((-1,) + (1,) * (w.ndim - 1)), beta - mean * scale


def init_conv_bn(k, w_shape, fan_in):
    k1, k2, k3, k4, k5 = jax.random.split(k, 5)
    cout = w_shape[0]
    w = jax.random.normal(k1, w_shape, jnp.float32) / np.sqrt(fan_in)
    gamma = 1.0 + 0.1 * jax.random.normal(k2, (cout,), jnp.float32)
    beta = 0.1 * jax.random.normal(k3, (cout,), jnp.float32)
    mean = 0.1 * jax.random.normal(k4, (cout,), jnp.float32)
    var = jax.random.uniform(k5, (cout,), jnp.float32, minval=0.5, maxval=1.5)
    return fold_bn(w, gamma, beta, mean, var)


def build_dw_masks_np():
    """(KS*KS, B*N) 0/1 masks: tap t is spatially valid for output token n."""
    m = np.zeros((KS * KS, N), np.float32)
    for i in range(H):
        for j in range(W):
            n = i * W + j
            for dy in range(KS):
                for dx in range(KS):
                    if 0 <= i - PAD + dy < H and 0 <= j - PAD + dx < W:
                        m[dy * KS + dx, n] = 1.0
    return np.tile(m, (1, B))                          # (KS*KS, LANES)


def build_attention_bias_idxs():
    points = list(itertools.product(range(RES), range(RES)))
    attention_offsets, idxs = {}, []
    for p1 in points:
        for p2 in points:
            off = (abs(p1[0] - p2[0]), abs(p1[1] - p2[1]))
            if off not in attention_offsets:
                attention_offsets[off] = len(attention_offsets)
            idxs.append(attention_offsets[off])
    return np.array(idxs, np.int32).reshape(N, N), len(attention_offsets)


def make_params(key):
    keys = jax.random.split(key, 2 * NUM_HEADS + 3)
    w_qkv, b_qkv, w_dw_conv, w_dw_flat, b_dw = [], [], [], [], []
    for h in range(NUM_HEADS):
        wq, bq = init_conv_bn(keys[h], (QKV_OUT, CG), CG)           # 1x1 conv
        w_qkv.append(wq)
        b_qkv.append(bq.reshape(QKV_OUT, 1))
        wd, bd = init_conv_bn(keys[NUM_HEADS + h],
                              (KEY_DIM, 1, KS, KS), KS * KS)        # dw conv
        w_dw_conv.append(wd)
        w_dw_flat.append(wd.reshape(KEY_DIM, KS * KS))
        b_dw.append(bd.reshape(KEY_DIM, 1))
    # proj Conv2d_BN (bn_weight_init=0 in the module; randomized here for a
    # non-degenerate deterministic test)
    w_proj, b_proj = init_conv_bn(keys[2 * NUM_HEADS],
                                  (DIM, NUM_HEADS * D), NUM_HEADS * D)
    idxs, n_off = build_attention_bias_idxs()
    attention_biases = 0.1 * jax.random.normal(
        keys[2 * NUM_HEADS + 1], (NUM_HEADS, n_off), jnp.float32)
    bias_attn = attention_biases[:, idxs]                           # (heads, N, N)
    # kernel-facing: block-diagonal bias over the folded (B*N, B*N) layout
    blk = np.kron(np.eye(B, dtype=np.float32), np.ones((N, N), np.float32))
    bias_full = jnp.where(jnp.asarray(blk)[None] > 0,
                          jnp.tile(bias_attn, (1, B, B)), NEG_INF)
    # kernel-facing dw-conv tap weights: per head/tap, weight * mask * scale,
    # shape (NUM_HEADS, KS*KS, KEY_DIM, LANES) -> one FMA per tap in-kernel.
    masks = jnp.asarray(build_dw_masks_np())                        # (KS*KS, LANES)
    w_dw_tap = jnp.stack([
        jnp.einsum("ct,tl->tcl", w_dw_flat[h] * SCALE, masks)
        for h in range(NUM_HEADS)])                                 # (heads, 25, KEY_DIM, LANES)
    b_dw_s = jnp.stack(b_dw)
    return {
        "w_qkv": jnp.stack(w_qkv),
        "b_qkv": jnp.stack(b_qkv),
        # reference-facing (original, unscaled) parameters
        "w_dw_conv": jnp.stack(w_dw_conv),
        "b_dw": b_dw_s,
        "bias_attn": bias_attn,
        # kernel-facing (scale/mask folded; block-diag bias over B*N lanes)
        "w_dw_tap": w_dw_tap,
        "b_dw_scaled": b_dw_s * SCALE,
        "bias_full": bias_full,
        "w_proj": w_proj,
        "b_proj": b_proj.reshape(DIM, 1),
    }


# ------------------------------ pure-JAX reference -----------------------------
def reference(x_nchw, p):
    feats_in = [x_nchw[:, h * CG:(h + 1) * CG] for h in range(NUM_HEADS)]
    feat = feats_in[0]
    outs = []
    for h in range(NUM_HEADS):
        if h > 0:
            feat = feat + feats_in[h]
        qkv = jnp.einsum("oc,bchw->bohw", p["w_qkv"][h], feat) \
            + p["b_qkv"][h].reshape(1, QKV_OUT, 1, 1)
        q, k, v = (qkv[:, :KEY_DIM], qkv[:, KEY_DIM:2 * KEY_DIM],
                   qkv[:, 2 * KEY_DIM:])
        q = lax.conv_general_dilated(
            q, p["w_dw_conv"][h], (1, 1), [(PAD, PAD), (PAD, PAD)],
            feature_group_count=KEY_DIM,
            dimension_numbers=("NCHW", "OIHW", "NCHW")) \
            + p["b_dw"][h].reshape(1, KEY_DIM, 1, 1)
        qf, kf, vf = (q.reshape(B, KEY_DIM, N), k.reshape(B, KEY_DIM, N),
                      v.reshape(B, D, N))
        attn = jnp.einsum("bcm,bcn->bmn", qf, kf) * SCALE + p["bias_attn"][h][None]
        attn = jax.nn.softmax(attn, axis=-1)
        feat = jnp.einsum("bdk,bqk->bdq", vf, attn).reshape(B, D, H, W)
        outs.append(feat)
    cat = jnp.concatenate(outs, axis=1)
    act = jnp.maximum(cat, 0.0)
    return jnp.einsum("oc,bchw->bohw", p["w_proj"], act) \
        + p["b_proj"].reshape(1, DIM, 1, 1)


# ------------------------------------- main -------------------------------------
if __name__ == "__main__":
    key = jax.random.PRNGKey(0)
    k_param, k_x = jax.random.split(key)
    params = make_params(k_param)
    x = jax.random.normal(k_x, (B, DIM, H, W), jnp.float32)

    out = jax.block_until_ready(cascaded_group_attention(x, params))
    ref = jax.block_until_ready(reference(x, params))

    # Tolerance widened vs an all-f32 version because MXU operands are fed
    # as bfloat16 (accumulation stays f32).
    np.testing.assert_allclose(np.asarray(out), np.asarray(ref),
                               atol=2e-2, rtol=2e-2)
    print("KERNEL_OK")
</pallas_src>

<mosaic_0001>
module attributes {stable_mosaic.version = 11 : i64} {
  func.func @cga_kernel(%arg0: memref<32x128xf32, #tpu.memory_space<vmem>>, %arg1: memref<2x32x16xf32, #tpu.memory_space<vmem>>, %arg2: memref<2x32x1xf32, #tpu.memory_space<vmem>>, %arg3: memref<2x25x8x128xf32, #tpu.memory_space<vmem>>, %arg4: memref<2x8x1xf32, #tpu.memory_space<vmem>>, %arg5: memref<2x128x128xf32, #tpu.memory_space<vmem>>, %arg6: memref<32x32xf32, #tpu.memory_space<vmem>>, %arg7: memref<32x1xf32, #tpu.memory_space<vmem>>, %arg8: memref<32x128xf32, #tpu.memory_space<vmem>>) attributes {dimension_semantics = [], scalar_prefetch = 0 : i64, scratch_operands = 0 : i64, tpu.core_type = #tpu.core_type<tc>} {
    %c0 = arith.constant 0 : index
    %c0_0 = arith.constant 0 : index
    %0 = vector.load %arg0[%c0, %c0_0] : memref<32x128xf32, #tpu.memory_space<vmem>>, vector<32x128xf32>
    %1 = vector.extract_strided_slice %0 {offsets = [0, 0], sizes = [16, 128], strides = [1, 1]} : vector<32x128xf32> to vector<16x128xf32>
    %c0_1 = arith.constant 0 : index
    %c0_2 = arith.constant 0 : index
    %c0_3 = arith.constant 0 : index
    %2 = vector.load %arg1[%c0_1, %c0_2, %c0_3] : memref<2x32x16xf32, #tpu.memory_space<vmem>>, vector<1x32x16xf32>
    %3 = vector.shape_cast %2 : vector<1x32x16xf32> to vector<32x16xf32>
    %4 = arith.truncf %3 : vector<32x16xf32> to vector<32x16xbf16>
    %5 = arith.truncf %1 : vector<16x128xf32> to vector<16x128xbf16>
    %cst = arith.constant dense<0.000000e+00> : vector<32x128xf32>
    %6 = tpu.matmul %4, %5, %cst {dimension_numbers = #tpu.dot_dimension_numbers<[1], [0], [0], [1], [0, 0, 1, 1], [], []>} : vector<32x16xbf16>, vector<16x128xbf16>, vector<32x128xf32> -> vector<32x128xf32>
    %c0_4 = arith.constant 0 : index
    %c0_5 = arith.constant 0 : index
    %c0_6 = arith.constant 0 : index
    %7 = vector.load %arg2[%c0_4, %c0_5, %c0_6] : memref<2x32x1xf32, #tpu.memory_space<vmem>>, vector<1x32x1xf32>
    %8 = vector.shape_cast %7 : vector<1x32x1xf32> to vector<32x1xf32>
    %9 = vector.broadcast %8 : vector<32x1xf32> to vector<32x128xf32>
    %10 = arith.addf %6, %9 : vector<32x128xf32>
    %11 = vector.extract_strided_slice %10 {offsets = [0, 0], sizes = [8, 128], strides = [1, 1]} : vector<32x128xf32> to vector<8x128xf32>
    %12 = vector.extract_strided_slice %10 {offsets = [8, 0], sizes = [8, 128], strides = [1, 1]} : vector<32x128xf32> to vector<8x128xf32>
    %13 = vector.extract_strided_slice %10 {offsets = [16, 0], sizes = [16, 128], strides = [1, 1]} : vector<32x128xf32> to vector<16x128xf32>
    %cst_7 = arith.constant 0.000000e+00 : f32
    %14 = vector.broadcast %cst_7 : f32 to vector<8x128xf32>
    %c18_i32 = arith.constant 18 : i32
    %15 = tpu.dynamic_rotate %11 by %c18_i32 dim 1 : vector<8x128xf32>, i32 -> vector<8x128xf32>
    %c0_8 = arith.constant 0 : index
    %c0_9 = arith.constant 0 : index
    %c0_10 = arith.constant 0 : index
    %c0_11 = arith.constant 0 : index
    %16 = vector.load %arg3[%c0_8, %c0_9, %c0_10, %c0_11] : memref<2x25x8x128xf32, #tpu.memory_space<vmem>>, vector<1x1x8x128xf32>
    %17 = vector.shape_cast %16 : vector<1x1x8x128xf32> to vector<8x128xf32>
    %18 = arith.mulf %17, %15 : vector<8x128xf32>
    %19 = arith.addf %14, %18 : vector<8x128xf32>
    %c17_i32 = arith.constant 17 : i32
    %20 = tpu.dynamic_rotate %11 by %c17_i32 dim 1 : vector<8x128xf32>, i32 -> vector<8x128xf32>
    %c0_12 = arith.constant 0 : index
    %c1 = arith.constant 1 : index
    %c0_13 = arith.constant 0 : index
    %c0_14 = arith.constant 0 : index
    %21 = vector.load %arg3[%c0_12, %c1, %c0_13, %c0_14] : memref<2x25x8x128xf32, #tpu.memory_space<vmem>>, vector<1x1x8x128xf32>
    %22 = vector.shape_cast %21 : vector<1x1x8x128xf32> to vector<8x128xf32>
    %23 = arith.mulf %22, %20 : vector<8x128xf32>
    %24 = arith.addf %19, %23 : vector<8x128xf32>
    %c16_i32 = arith.constant 16 : i32
    %25 = tpu.dynamic_rotate %11 by %c16_i32 dim 1 : vector<8x128xf32>, i32 -> vector<8x128xf32>
    %c0_15 = arith.constant 0 : index
    %c2 = arith.constant 2 : index
    %c0_16 = arith.constant 0 : index
    %c0_17 = arith.constant 0 : index
    %26 = vector.load %arg3[%c0_15, %c2, %c0_16, %c0_17] : memref<2x25x8x128xf32, #tpu.memory_space<vmem>>, vector<1x1x8x128xf32>
    %27 = vector.shape_cast %26 : vector<1x1x8x128xf32> to vector<8x128xf32>
    %28 = arith.mulf %27, %25 : vector<8x128xf32>
    %29 = arith.addf %24, %28 : vector<8x128xf32>
    %c15_i32 = arith.constant 15 : i32
    %30 = tpu.dynamic_rotate %11 by %c15_i32 dim 1 : vector<8x128xf32>, i32 -> vector<8x128xf32>
    %c0_18 = arith.constant 0 : index
    %c3 = arith.constant 3 : index
    %c0_19 = arith.constant 0 : index
    %c0_20 = arith.constant 0 : index
    %31 = vector.load %arg3[%c0_18, %c3, %c0_19, %c0_20] : memref<2x25x8x128xf32, #tpu.memory_space<vmem>>, vector<1x1x8x128xf32>
    %32 = vector.shape_cast %31 : vector<1x1x8x128xf32> to vector<8x128xf32>
    %33 = arith.mulf %32, %30 : vector<8x128xf32>
    %34 = arith.addf %29, %33 : vector<8x128xf32>
    %c14_i32 = arith.constant 14 : i32
    %35 = tpu.dynamic_rotate %11 by %c14_i32 dim 1 : vector<8x128xf32>, i32 -> vector<8x128xf32>
    %c0_21 = arith.constant 0 : index
    %c4 = arith.constant 4 : index
    %c0_22 = arith.constant 0 : index
    %c0_23 = arith.constant 0 : index
    %36 = vector.load %arg3[%c0_21, %c4, %c0_22, %c0_23] : memref<2x25x8x128xf32, #tpu.memory_space<vmem>>, vector<1x1x8x128xf32>
    %37 = vector.shape_cast %36 : vector<1x1x8x128xf32> to vector<8x128xf32>
    %38 = arith.mulf %37, %35 : vector<8x128xf32>
    %39 = arith.addf %34, %38 : vector<8x128xf32>
    %c10_i32 = arith.constant 10 : i32
    %40 = tpu.dynamic_rotate %11 by %c10_i32 dim 1 : vector<8x128xf32>, i32 -> vector<8x128xf32>
    %c0_24 = arith.constant 0 : index
    %c5 = arith.constant 5 : index
    %c0_25 = arith.constant 0 : index
    %c0_26 = arith.constant 0 : index
    %41 = vector.load %arg3[%c0_24, %c5, %c0_25, %c0_26] : memref<2x25x8x128xf32, #tpu.memory_space<vmem>>, vector<1x1x8x128xf32>
    %42 = vector.shape_cast %41 : vector<1x1x8x128xf32> to vector<8x128xf32>
    %43 = arith.mulf %42, %40 : vector<8x128xf32>
    %44 = arith.addf %39, %43 : vector<8x128xf32>
    %c9_i32 = arith.constant 9 : i32
    %45 = tpu.dynamic_rotate %11 by %c9_i32 dim 1 : vector<8x128xf32>, i32 -> vector<8x128xf32>
    %c0_27 = arith.constant 0 : index
    %c6 = arith.constant 6 : index
    %c0_28 = arith.constant 0 : index
    %c0_29 = arith.constant 0 : index
    %46 = vector.load %arg3[%c0_27, %c6, %c0_28, %c0_29] : memref<2x25x8x128xf32, #tpu.memory_space<vmem>>, vector<1x1x8x128xf32>
    %47 = vector.shape_cast %46 : vector<1x1x8x128xf32> to vector<8x128xf32>
    %48 = arith.mulf %47, %45 : vector<8x128xf32>
    %49 = arith.addf %44, %48 : vector<8x128xf32>
    %c8_i32 = arith.constant 8 : i32
    %50 = tpu.dynamic_rotate %11 by %c8_i32 dim 1 : vector<8x128xf32>, i32 -> vector<8x128xf32>
    %c0_30 = arith.constant 0 : index
    %c7 = arith.constant 7 : index
    %c0_31 = arith.constant 0 : index
    %c0_32 = arith.constant 0 : index
    %51 = vector.load %arg3[%c0_30, %c7, %c0_31, %c0_32] : memref<2x25x8x128xf32, #tpu.memory_space<vmem>>, vector<1x1x8x128xf32>
    %52 = vector.shape_cast %51 : vector<1x1x8x128xf32> to vector<8x128xf32>
    %53 = arith.mulf %52, %50 : vector<8x128xf32>
    %54 = arith.addf %49, %53 : vector<8x128xf32>
    %c7_i32 = arith.constant 7 : i32
    %55 = tpu.dynamic_rotate %11 by %c7_i32 dim 1 : vector<8x128xf32>, i32 -> vector<8x128xf32>
    %c0_33 = arith.constant 0 : index
    %c8 = arith.constant 8 : index
    %c0_34 = arith.constant 0 : index
    %c0_35 = arith.constant 0 : index
    %56 = vector.load %arg3[%c0_33, %c8, %c0_34, %c0_35] : memref<2x25x8x128xf32, #tpu.memory_space<vmem>>, vector<1x1x8x128xf32>
    %57 = vector.shape_cast %56 : vector<1x1x8x128xf32> to vector<8x128xf32>
    %58 = arith.mulf %57, %55 : vector<8x128xf32>
    %59 = arith.addf %54, %58 : vector<8x128xf32>
    %c6_i32 = arith.constant 6 : i32
    %60 = tpu.dynamic_rotate %11 by %c6_i32 dim 1 : vector<8x128xf32>, i32 -> vector<8x128xf32>
    %c0_36 = arith.constant 0 : index
    %c9 = arith.constant 9 : index
    %c0_37 = arith.constant 0 : index
    %c0_38 = arith.constant 0 : index
    %61 = vector.load %arg3[%c0_36, %c9, %c0_37, %c0_38] : memref<2x25x8x128xf32, #tpu.memory_space<vmem>>, vector<1x1x8x128xf32>
    %62 = vector.shape_cast %61 : vector<1x1x8x128xf32> to vector<8x128xf32>
    %63 = arith.mulf %62, %60 : vector<8x128xf32>
    %64 = arith.addf %59, %63 : vector<8x128xf32>
    %c2_i32 = arith.constant 2 : i32
    %65 = tpu.dynamic_rotate %11 by %c2_i32 dim 1 : vector<8x128xf32>, i32 -> vector<8x128xf32>
    %c0_39 = arith.constant 0 : index
    %c10 = arith.constant 10 : index
    %c0_40 = arith.constant 0 : index
    %c0_41 = arith.constant 0 : index
    %66 = vector.load %arg3[%c0_39, %c10, %c0_40, %c0_41] : memref<2x25x8x128xf32, #tpu.memory_space<vmem>>, vector<1x1x8x128xf32>
    %67 = vector.shape_cast %66 : vector<1x1x8x128xf32> to vector<8x128xf32>
    %68 = arith.mulf %67, %65 : vector<8x128xf32>
    %69 = arith.addf %64, %68 : vector<8x128xf32>
    %c1_i32 = arith.constant 1 : i32
    %70 = tpu.dynamic_rotate %11 by %c1_i32 dim 1 : vector<8x128xf32>, i32 -> vector<8x128xf32>
    %c0_42 = arith.constant 0 : index
    %c11 = arith.constant 11 : index
    %c0_43 = arith.constant 0 : index
    %c0_44 = arith.constant 0 : index
    %71 = vector.load %arg3[%c0_42, %c11, %c0_43, %c0_44] : memref<2x25x8x128xf32, #tpu.memory_space<vmem>>, vector<1x1x8x128xf32>
    %72 = vector.shape_cast %71 : vector<1x1x8x128xf32> to vector<8x128xf32>
    %73 = arith.mulf %72, %70 : vector<8x128xf32>
    %74 = arith.addf %69, %73 : vector<8x128xf32>
    %c0_45 = arith.constant 0 : index
    %c12 = arith.constant 12 : index
    %c0_46 = arith.constant 0 : index
    %c0_47 = arith.constant 0 : index
    %75 = vector.load %arg3[%c0_45, %c12, %c0_46, %c0_47] : memref<2x25x8x128xf32, #tpu.memory_space<vmem>>, vector<1x1x8x128xf32>
    %76 = vector.shape_cast %75 : vector<1x1x8x128xf32> to vector<8x128xf32>
    %77 = arith.mulf %76, %11 : vector<8x128xf32>
    %78 = arith.addf %74, %77 : vector<8x128xf32>
    %c127_i32 = arith.constant 127 : i32
    %79 = tpu.dynamic_rotate %11 by %c127_i32 dim 1 : vector<8x128xf32>, i32 -> vector<8x128xf32>
    %c0_48 = arith.constant 0 : index
    %c13 = arith.constant 13 : index
    %c0_49 = arith.constant 0 : index
    %c0_50 = arith.constant 0 : index
    %80 = vector.load %arg3[%c0_48, %c13, %c0_49, %c0_50] : memref<2x25x8x128xf32, #tpu.memory_space<vmem>>, vector<1x1x8x128xf32>
    %81 = vector.shape_cast %80 : vector<1x1x8x128xf32> to vector<8x128xf32>
    %82 = arith.mulf %81, %79 : vector<8x128xf32>
    %83 = arith.addf %78, %82 : vector<8x128xf32>
    %c126_i32 = arith.constant 126 : i32
    %84 = tpu.dynamic_rotate %11 by %c126_i32 dim 1 : vector<8x128xf32>, i32 -> vector<8x128xf32>
    %c0_51 = arith.constant 0 : index
    %c14 = arith.constant 14 : index
    %c0_52 = arith.constant 0 : index
    %c0_53 = arith.constant 0 : index
    %85 = vector.load %arg3[%c0_51, %c14, %c0_52, %c0_53] : memref<2x25x8x128xf32, #tpu.memory_space<vmem>>, vector<1x1x8x128xf32>
    %86 = vector.shape_cast %85 : vector<1x1x8x128xf32> to vector<8x128xf32>
    %87 = arith.mulf %86, %84 : vector<8x128xf32>
    %88 = arith.addf %83, %87 : vector<8x128xf32>
    %c122_i32 = arith.constant 122 : i32
    %89 = tpu.dynamic_rotate %11 by %c122_i32 dim 1 : vector<8x128xf32>, i32 -> vector<8x128xf32>
    %c0_54 = arith.constant 0 : index
    %c15 = arith.constant 15 : index
    %c0_55 = arith.constant 0 : index
    %c0_56 = arith.constant 0 : index
    %90 = vector.load %arg3[%c0_54, %c15, %c0_55, %c0_56] : memref<2x25x8x128xf32, #tpu.memory_space<vmem>>, vector<1x1x8x128xf32>
    %91 = vector.shape_cast %90 : vector<1x1x8x128xf32> to vector<8x128xf32>
    %92 = arith.mulf %91, %89 : vector<8x128xf32>
    %93 = arith.addf %88, %92 : vector<8x128xf32>
    %c121_i32 = arith.constant 121 : i32
    %94 = tpu.dynamic_rotate %11 by %c121_i32 dim 1 : vector<8x128xf32>, i32 -> vector<8x128xf32>
    %c0_57 = arith.constant 0 : index
    %c16 = arith.constant 16 : index
    %c0_58 = arith.constant 0 : index
    %c0_59 = arith.constant 0 : index
    %95 = vector.load %arg3[%c0_57, %c16, %c0_58, %c0_59] : memref<2x25x8x128xf32, #tpu.memory_space<vmem>>, vector<1x1x8x128xf32>
    %96 = vector.shape_cast %95 : vector<1x1x8x128xf32> to vector<8x128xf32>
    %97 = arith.mulf %96, %94 : vector<8x128xf32>
    %98 = arith.addf %93, %97 : vector<8x128xf32>
    %c120_i32 = arith.constant 120 : i32
    %99 = tpu.dynamic_rotate %11 by %c120_i32 dim 1 : vector<8x128xf32>, i32 -> vector<8x128xf32>
    %c0_60 = arith.constant 0 : index
    %c17 = arith.constant 17 : index
    %c0_61 = arith.constant 0 : index
    %c0_62 = arith.constant 0 : index
    %100 = vector.load %arg3[%c0_60, %c17, %c0_61, %c0_62] : memref<2x25x8x128xf32, #tpu.memory_space<vmem>>, vector<1x1x8x128xf32>
    %101 = vector.shape_cast %100 : vector<1x1x8x128xf32> to vector<8x128xf32>
    %102 = arith.mulf %101, %99 : vector<8x128xf32>
    %103 = arith.addf %98, %102 : vector<8x128xf32>
    %c119_i32 = arith.constant 119 : i32
    %104 = tpu.dynamic_rotate %11 by %c119_i32 dim 1 : vector<8x128xf32>, i32 -> vector<8x128xf32>
    %c0_63 = arith.constant 0 : index
    %c18 = arith.constant 18 : index
    %c0_64 = arith.constant 0 : index
    %c0_65 = arith.constant 0 : index
    %105 = vector.load %arg3[%c0_63, %c18, %c0_64, %c0_65] : memref<2x25x8x128xf32, #tpu.memory_space<vmem>>, vector<1x1x8x128xf32>
    %106 = vector.shape_cast %105 : vector<1x1x8x128xf32> to vector<8x128xf32>
    %107 = arith.mulf %106, %104 : vector<8x128xf32>
    %108 = arith.addf %103, %107 : vector<8x128xf32>
    %c118_i32 = arith.constant 118 : i32
    %109 = tpu.dynamic_rotate %11 by %c118_i32 dim 1 : vector<8x128xf32>, i32 -> vector<8x128xf32>
    %c0_66 = arith.constant 0 : index
    %c19 = arith.constant 19 : index
    %c0_67 = arith.constant 0 : index
    %c0_68 = arith.constant 0 : index
    %110 = vector.load %arg3[%c0_66, %c19, %c0_67, %c0_68] : memref<2x25x8x128xf32, #tpu.memory_space<vmem>>, vector<1x1x8x128xf32>
    %111 = vector.shape_cast %110 : vector<1x1x8x128xf32> to vector<8x128xf32>
    %112 = arith.mulf %111, %109 : vector<8x128xf32>
    %113 = arith.addf %108, %112 : vector<8x128xf32>
    %c114_i32 = arith.constant 114 : i32
    %114 = tpu.dynamic_rotate %11 by %c114_i32 dim 1 : vector<8x128xf32>, i32 -> vector<8x128xf32>
    %c0_69 = arith.constant 0 : index
    %c20 = arith.constant 20 : index
    %c0_70 = arith.constant 0 : index
    %c0_71 = arith.constant 0 : index
    %115 = vector.load %arg3[%c0_69, %c20, %c0_70, %c0_71] : memref<2x25x8x128xf32, #tpu.memory_space<vmem>>, vector<1x1x8x128xf32>
    %116 = vector.shape_cast %115 : vector<1x1x8x128xf32> to vector<8x128xf32>
    %117 = arith.mulf %116, %114 : vector<8x128xf32>
    %118 = arith.addf %113, %117 : vector<8x128xf32>
    %c113_i32 = arith.constant 113 : i32
    %119 = tpu.dynamic_rotate %11 by %c113_i32 dim 1 : vector<8x128xf32>, i32 -> vector<8x128xf32>
    %c0_72 = arith.constant 0 : index
    %c21 = arith.constant 21 : index
    %c0_73 = arith.constant 0 : index
    %c0_74 = arith.constant 0 : index
    %120 = vector.load %arg3[%c0_72, %c21, %c0_73, %c0_74] : memref<2x25x8x128xf32, #tpu.memory_space<vmem>>, vector<1x1x8x128xf32>
    %121 = vector.shape_cast %120 : vector<1x1x8x128xf32> to vector<8x128xf32>
    %122 = arith.mulf %121, %119 : vector<8x128xf32>
    %123 = arith.addf %118, %122 : vector<8x128xf32>
    %c112_i32 = arith.constant 112 : i32
    %124 = tpu.dynamic_rotate %11 by %c112_i32 dim 1 : vector<8x128xf32>, i32 -> vector<8x128xf32>
    %c0_75 = arith.constant 0 : index
    %c22 = arith.constant 22 : index
    %c0_76 = arith.constant 0 : index
    %c0_77 = arith.constant 0 : index
    %125 = vector.load %arg3[%c0_75, %c22, %c0_76, %c0_77] : memref<2x25x8x128xf32, #tpu.memory_space<vmem>>, vector<1x1x8x128xf32>
    %126 = vector.shape_cast %125 : vector<1x1x8x128xf32> to vector<8x128xf32>
    %127 = arith.mulf %126, %124 : vector<8x128xf32>
    %128 = arith.addf %123, %127 : vector<8x128xf32>
    %c111_i32 = arith.constant 111 : i32
    %129 = tpu.dynamic_rotate %11 by %c111_i32 dim 1 : vector<8x128xf32>, i32 -> vector<8x128xf32>
    %c0_78 = arith.constant 0 : index
    %c23 = arith.constant 23 : index
    %c0_79 = arith.constant 0 : index
    %c0_80 = arith.constant 0 : index
    %130 = vector.load %arg3[%c0_78, %c23, %c0_79, %c0_80] : memref<2x25x8x128xf32, #tpu.memory_space<vmem>>, vector<1x1x8x128xf32>
    %131 = vector.shape_cast %130 : vector<1x1x8x128xf32> to vector<8x128xf32>
    %132 = arith.mulf %131, %129 : vector<8x128xf32>
    %133 = arith.addf %128, %132 : vector<8x128xf32>
    %c110_i32 = arith.constant 110 : i32
    %134 = tpu.dynamic_rotate %11 by %c110_i32 dim 1 : vector<8x128xf32>, i32 -> vector<8x128xf32>
    %c0_81 = arith.constant 0 : index
    %c24 = arith.constant 24 : index
    %c0_82 = arith.constant 0 : index
    %c0_83 = arith.constant 0 : index
    %135 = vector.load %arg3[%c0_81, %c24, %c0_82, %c0_83] : memref<2x25x8x128xf32, #tpu.memory_space<vmem>>, vector<1x1x8x128xf32>
    %136 = vector.shape_cast %135 : vector<1x1x8x128xf32> to vector<8x128xf32>
    %137 = arith.mulf %136, %134 : vector<8x128xf32>
    %138 = arith.addf %133, %137 : vector<8x128xf32>
    %c0_84 = arith.constant 0 : index
    %c0_85 = arith.constant 0 : index
    %c0_86 = arith.constant 0 : index
    %139 = vector.load %arg4[%c0_84, %c0_85, %c0_86] : memref<2x8x1xf32, #tpu.memory_space<vmem>>, vector<1x8x1xf32>
    %140 = vector.shape_cast %139 : vector<1x8x1xf32> to vector<8x1xf32>
    %141 = vector.broadcast %140 : vector<8x1xf32> to vector<8x128xf32>
    %142 = arith.addf %138, %141 : vector<8x128xf32>
    %143 = arith.truncf %142 : vector<8x128xf32> to vector<8x128xbf16>
    %144 = arith.truncf %12 : vector<8x128xf32> to vector<8x128xbf16>
    %cst_87 = arith.constant dense<0.000000e+00> : vector<128x128xf32>
    %145 = tpu.matmul %143, %144, %cst_87 {dimension_numbers = #tpu.dot_dimension_numbers<[0], [0], [1], [1], [0, 1, 1, 1], [], []>} : vector<8x128xbf16>, vector<8x128xbf16>, vector<128x128xf32> -> vector<128x128xf32>
    %c0_88 = arith.constant 0 : index
    %c0_89 = arith.constant 0 : index
    %c0_90 = arith.constant 0 : index
    %146 = vector.load %arg5[%c0_88, %c0_89, %c0_90] : memref<2x128x128xf32, #tpu.memory_space<vmem>>, vector<1x128x128xf32>
    %147 = vector.shape_cast %146 : vector<1x128x128xf32> to vector<128x128xf32>
    %148 = arith.addf %145, %147 : vector<128x128xf32>
    %cst_91 = arith.constant dense<0xFF800000> : vector<128xf32>
    %149 = vector.multi_reduction <maximumf>, %148, %cst_91 [1] : vector<128x128xf32> to vector<128xf32>
    %150 = vector.shape_cast %149 : vector<128xf32> to vector<128x1xf32>
    %151 = vector.broadcast %150 : vector<128x1xf32> to vector<128x128xf32>
    %152 = arith.subf %148, %151 : vector<128x128xf32>
    %153 = math.exp %152 : vector<128x128xf32>
    %cst_92 = arith.constant dense<0.000000e+00> : vector<128xf32>
    %154 = vector.multi_reduction <add>, %153, %cst_92 [1] : vector<128x128xf32> to vector<128xf32>
    %155 = vector.shape_cast %154 : vector<128xf32> to vector<128x1xf32>
    %156 = tpu.reciprocal %155 {approx = true} : vector<128x1xf32> -> vector<128x1xf32>
    %157 = vector.broadcast %156 : vector<128x1xf32> to vector<128x128xf32>
    %158 = arith.mulf %153, %157 : vector<128x128xf32>
    %159 = arith.truncf %13 : vector<16x128xf32> to vector<16x128xbf16>
    %160 = arith.truncf %158 : vector<128x128xf32> to vector<128x128xbf16>
    %cst_93 = arith.constant dense<0.000000e+00> : vector<16x128xf32>
    %161 = tpu.matmul %159, %160, %cst_93 {dimension_numbers = #tpu.dot_dimension_numbers<[1], [1], [0], [0], [0, 0, 1, 0], [], []>} : vector<16x128xbf16>, vector<128x128xbf16>, vector<16x128xf32> -> vector<16x128xf32>
    %162 = vector.extract_strided_slice %0 {offsets = [16, 0], sizes = [16, 128], strides = [1, 1]} : vector<32x128xf32> to vector<16x128xf32>
    %163 = arith.addf %161, %162 : vector<16x128xf32>
    %c1_94 = arith.constant 1 : index
    %c0_95 = arith.constant 0 : index
    %c0_96 = arith.constant 0 : index
    %164 = vector.load %arg1[%c1_94, %c0_95, %c0_96] : memref<2x32x16xf32, #tpu.memory_space<vmem>>, vector<1x32x16xf32>
    %165 = vector.shape_cast %164 : vector<1x32x16xf32> to vector<32x16xf32>
    %166 = arith.truncf %165 : vector<32x16xf32> to vector<32x16xbf16>
    %167 = arith.truncf %163 : vector<16x128xf32> to vector<16x128xbf16>
    %cst_97 = arith.constant dense<0.000000e+00> : vector<32x128xf32>
    %168 = tpu.matmul %166, %167, %cst_97 {dimension_numbers = #tpu.dot_dimension_numbers<[1], [0], [0], [1], [0, 0, 1, 1], [], []>} : vector<32x16xbf16>, vector<16x128xbf16>, vector<32x128xf32> -> vector<32x128xf32>
    %c1_98 = arith.constant 1 : index
    %c0_99 = arith.constant 0 : index
    %c0_100 = arith.constant 0 : index
    %169 = vector.load %arg2[%c1_98, %c0_99, %c0_100] : memref<2x32x1xf32, #tpu.memory_space<vmem>>, vector<1x32x1xf32>
    %170 = vector.shape_cast %169 : vector<1x32x1xf32> to vector<32x1xf32>
    %171 = vector.broadcast %170 : vector<32x1xf32> to vector<32x128xf32>
    %172 = arith.addf %168, %171 : vector<32x128xf32>
    %173 = vector.extract_strided_slice %172 {offsets = [0, 0], sizes = [8, 128], strides = [1, 1]} : vector<32x128xf32> to vector<8x128xf32>
    %174 = vector.extract_strided_slice %172 {offsets = [8, 0], sizes = [8, 128], strides = [1, 1]} : vector<32x128xf32> to vector<8x128xf32>
    %175 = vector.extract_strided_slice %172 {offsets = [16, 0], sizes = [16, 128], strides = [1, 1]} : vector<32x128xf32> to vector<16x128xf32>
    %cst_101 = arith.constant 0.000000e+00 : f32
    %176 = vector.broadcast %cst_101 : f32 to vector<8x128xf32>
    %c18_i32_102 = arith.constant 18 : i32
    %177 = tpu.dynamic_rotate %173 by %c18_i32_102 dim 1 : vector<8x128xf32>, i32 -> vector<8x128xf32>
    %c1_103 = arith.constant 1 : index
    %c0_104 = arith.constant 0 : index
    %c0_105 = arith.constant 0 : index
    %c0_106 = arith.constant 0 : index
    %178 = vector.load %arg3[%c1_103, %c0_104, %c0_105, %c0_106] : memref<2x25x8x128xf32, #tpu.memory_space<vmem>>, vector<1x1x8x128xf32>
    %179 = vector.shape_cast %178 : vector<1x1x8x128xf32> to vector<8x128xf32>
    %180 = arith.mulf %179, %177 : vector<8x128xf32>
    %181 = arith.addf %176, %180 : vector<8x128xf32>
    %c17_i32_107 = arith.constant 17 : i32
    %182 = tpu.dynamic_rotate %173 by %c17_i32_107 dim 1 : vector<8x128xf32>, i32 -> vector<8x128xf32>
    %c1_108 = arith.constant 1 : index
    %c1_109 = arith.constant 1 : index
    %c0_110 = arith.constant 0 : index
    %c0_111 = arith.constant 0 : index
    %183 = vector.load %arg3[%c1_108, %c1_109, %c0_110, %c0_111] : memref<2x25x8x128xf32, #tpu.memory_space<vmem>>, vector<1x1x8x128xf32>
    %184 = vector.shape_cast %183 : vector<1x1x8x128xf32> to vector<8x128xf32>
    %185 = arith.mulf %184, %182 : vector<8x128xf32>
    %186 = arith.addf %181, %185 : vector<8x128xf32>
    %c16_i32_112 = arith.constant 16 : i32
    %187 = tpu.dynamic_rotate %173 by %c16_i32_112 dim 1 : vector<8x128xf32>, i32 -> vector<8x128xf32>
    %c1_113 = arith.constant 1 : index
    %c2_114 = arith.constant 2 : index
    %c0_115 = arith.constant 0 : index
    %c0_116 = arith.constant 0 : index
    %188 = vector.load %arg3[%c1_113, %c2_114, %c0_115, %c0_116] : memref<2x25x8x128xf32, #tpu.memory_space<vmem>>, vector<1x1x8x128xf32>
    %189 = vector.shape_cast %188 : vector<1x1x8x128xf32> to vector<8x128xf32>
    %190 = arith.mulf %189, %187 : vector<8x128xf32>
    %191 = arith.addf %186, %190 : vector<8x128xf32>
    %c15_i32_117 = arith.constant 15 : i32
    %192 = tpu.dynamic_rotate %173 by %c15_i32_117 dim 1 : vector<8x128xf32>, i32 -> vector<8x128xf32>
    %c1_118 = arith.constant 1 : index
    %c3_119 = arith.constant 3 : index
    %c0_120 = arith.constant 0 : index
    %c0_121 = arith.constant 0 : index
    %193 = vector.load %arg3[%c1_118, %c3_119, %c0_120, %c0_121] : memref<2x25x8x128xf32, #tpu.memory_space<vmem>>, vector<1x1x8x128xf32>
    %194 = vector.shape_cast %193 : vector<1x1x8x128xf32> to vector<8x128xf32>
    %195 = arith.mulf %194, %192 : vector<8x128xf32>
    %196 = arith.addf %191, %195 : vector<8x128xf32>
    %c14_i32_122 = arith.constant 14 : i32
    %197 = tpu.dynamic_rotate %173 by %c14_i32_122 dim 1 : vector<8x128xf32>, i32 -> vector<8x128xf32>
    %c1_123 = arith.constant 1 : index
    %c4_124 = arith.constant 4 : index
    %c0_125 = arith.constant 0 : index
    %c0_126 = arith.constant 0 : index
    %198 = vector.load %arg3[%c1_123, %c4_124, %c0_125, %c0_126] : memref<2x25x8x128xf32, #tpu.memory_space<vmem>>, vector<1x1x8x128xf32>
    %199 = vector.shape_cast %198 : vector<1x1x8x128xf32> to vector<8x128xf32>
    %200 = arith.mulf %199, %197 : vector<8x128xf32>
    %201 = arith.addf %196, %200 : vector<8x128xf32>
    %c10_i32_127 = arith.constant 10 : i32
    %202 = tpu.dynamic_rotate %173 by %c10_i32_127 dim 1 : vector<8x128xf32>, i32 -> vector<8x128xf32>
    %c1_128 = arith.constant 1 : index
    %c5_129 = arith.constant 5 : index
    %c0_130 = arith.constant 0 : index
    %c0_131 = arith.constant 0 : index
    %203 = vector.load %arg3[%c1_128, %c5_129, %c0_130, %c0_131] : memref<2x25x8x128xf32, #tpu.memory_space<vmem>>, vector<1x1x8x128xf32>
    %204 = vector.shape_cast %203 : vector<1x1x8x128xf32> to vector<8x128xf32>
    %205 = arith.mulf %204, %202 : vector<8x128xf32>
    %206 = arith.addf %201, %205 : vector<8x128xf32>
    %c9_i32_132 = arith.constant 9 : i32
    %207 = tpu.dynamic_rotate %173 by %c9_i32_132 dim 1 : vector<8x128xf32>, i32 -> vector<8x128xf32>
    %c1_133 = arith.constant 1 : index
    %c6_134 = arith.constant 6 : index
    %c0_135 = arith.constant 0 : index
    %c0_136 = arith.constant 0 : index
    %208 = vector.load %arg3[%c1_133, %c6_134, %c0_135, %c0_136] : memref<2x25x8x128xf32, #tpu.memory_space<vmem>>, vector<1x1x8x128xf32>
    %209 = vector.shape_cast %208 : vector<1x1x8x128xf32> to vector<8x128xf32>
    %210 = arith.mulf %209, %207 : vector<8x128xf32>
    %211 = arith.addf %206, %210 : vector<8x128xf32>
    %c8_i32_137 = arith.constant 8 : i32
    %212 = tpu.dynamic_rotate %173 by %c8_i32_137 dim 1 : vector<8x128xf32>, i32 -> vector<8x128xf32>
    %c1_138 = arith.constant 1 : index
    %c7_139 = arith.constant 7 : index
    %c0_140 = arith.constant 0 : index
    %c0_141 = arith.constant 0 : index
    %213 = vector.load %arg3[%c1_138, %c7_139, %c0_140, %c0_141] : memref<2x25x8x128xf32, #tpu.memory_space<vmem>>, vector<1x1x8x128xf32>
    %214 = vector.shape_cast %213 : vector<1x1x8x128xf32> to vector<8x128xf32>
    %215 = arith.mulf %214, %212 : vector<8x128xf32>
    %216 = arith.addf %211, %215 : vector<8x128xf32>
    %c7_i32_142 = arith.constant 7 : i32
    %217 = tpu.dynamic_rotate %173 by %c7_i32_142 dim 1 : vector<8x128xf32>, i32 -> vector<8x128xf32>
    %c1_143 = arith.constant 1 : index
    %c8_144 = arith.constant 8 : index
    %c0_145 = arith.constant 0 : index
    %c0_146 = arith.constant 0 : index
    %218 = vector.load %arg3[%c1_143, %c8_144, %c0_145, %c0_146] : memref<2x25x8x128xf32, #tpu.memory_space<vmem>>, vector<1x1x8x128xf32>
    %219 = vector.shape_cast %218 : vector<1x1x8x128xf32> to vector<8x128xf32>
    %220 = arith.mulf %219, %217 : vector<8x128xf32>
    %221 = arith.addf %216, %220 : vector<8x128xf32>
    %c6_i32_147 = arith.constant 6 : i32
    %222 = tpu.dynamic_rotate %173 by %c6_i32_147 dim 1 : vector<8x128xf32>, i32 -> vector<8x128xf32>
    %c1_148 = arith.constant 1 : index
    %c9_149 = arith.constant 9 : index
    %c0_150 = arith.constant 0 : index
    %c0_151 = arith.constant 0 : index
    %223 = vector.load %arg3[%c1_148, %c9_149, %c0_150, %c0_151] : memref<2x25x8x128xf32, #tpu.memory_space<vmem>>, vector<1x1x8x128xf32>
    %224 = vector.shape_cast %223 : vector<1x1x8x128xf32> to vector<8x128xf32>
    %225 = arith.mulf %224, %222 : vector<8x128xf32>
    %226 = arith.addf %221, %225 : vector<8x128xf32>
    %c2_i32_152 = arith.constant 2 : i32
    %227 = tpu.dynamic_rotate %173 by %c2_i32_152 dim 1 : vector<8x128xf32>, i32 -> vector<8x128xf32>
    %c1_153 = arith.constant 1 : index
    %c10_154 = arith.constant 10 : index
    %c0_155 = arith.constant 0 : index
    %c0_156 = arith.constant 0 : index
    %228 = vector.load %arg3[%c1_153, %c10_154, %c0_155, %c0_156] : memref<2x25x8x128xf32, #tpu.memory_space<vmem>>, vector<1x1x8x128xf32>
    %229 = vector.shape_cast %228 : vector<1x1x8x128xf32> to vector<8x128xf32>
    %230 = arith.mulf %229, %227 : vector<8x128xf32>
    %231 = arith.addf %226, %230 : vector<8x128xf32>
    %c1_i32_157 = arith.constant 1 : i32
    %232 = tpu.dynamic_rotate %173 by %c1_i32_157 dim 1 : vector<8x128xf32>, i32 -> vector<8x128xf32>
    %c1_158 = arith.constant 1 : index
    %c11_159 = arith.constant 11 : index
    %c0_160 = arith.constant 0 : index
    %c0_161 = arith.constant 0 : index
    %233 = vector.load %arg3[%c1_158, %c11_159, %c0_160, %c0_161] : memref<2x25x8x128xf32, #tpu.memory_space<vmem>>, vector<1x1x8x128xf32>
    %234 = vector.shape_cast %233 : vector<1x1x8x128xf32> to vector<8x128xf32>
    %235 = arith.mulf %234, %232 : vector<8x128xf32>
    %236 = arith.addf %231, %235 : vector<8x128xf32>
    %c1_162 = arith.constant 1 : index
    %c12_163 = arith.constant 12 : index
    %c0_164 = arith.constant 0 : index
    %c0_165 = arith.constant 0 : index
    %237 = vector.load %arg3[%c1_162, %c12_163, %c0_164, %c0_165] : memref<2x25x8x128xf32, #tpu.memory_space<vmem>>, vector<1x1x8x128xf32>
    %238 = vector.shape_cast %237 : vector<1x1x8x128xf32> to vector<8x128xf32>
    %239 = arith.mulf %238, %173 : vector<8x128xf32>
    %240 = arith.addf %236, %239 : vector<8x128xf32>
    %c127_i32_166 = arith.constant 127 : i32
    %241 = tpu.dynamic_rotate %173 by %c127_i32_166 dim 1 : vector<8x128xf32>, i32 -> vector<8x128xf32>
    %c1_167 = arith.constant 1 : index
    %c13_168 = arith.constant 13 : index
    %c0_169 = arith.constant 0 : index
    %c0_170 = arith.constant 0 : index
    %242 = vector.load %arg3[%c1_167, %c13_168, %c0_169, %c0_170] : memref<2x25x8x128xf32, #tpu.memory_space<vmem>>, vector<1x1x8x128xf32>
    %243 = vector.shape_cast %242 : vector<1x1x8x128xf32> to vector<8x128xf32>
    %244 = arith.mulf %243, %241 : vector<8x128xf32>
    %245 = arith.addf %240, %244 : vector<8x128xf32>
    %c126_i32_171 = arith.constant 126 : i32
    %246 = tpu.dynamic_rotate %173 by %c126_i32_171 dim 1 : vector<8x128xf32>, i32 -> vector<8x128xf32>
    %c1_172 = arith.constant 1 : index
    %c14_173 = arith.constant 14 : index
    %c0_174 = arith.constant 0 : index
    %c0_175 = arith.constant 0 : index
    %247 = vector.load %arg3[%c1_172, %c14_173, %c0_174, %c0_175] : memref<2x25x8x128xf32, #tpu.memory_space<vmem>>, vector<1x1x8x128xf32>
    %248 = vector.shape_cast %247 : vector<1x1x8x128xf32> to vector<8x128xf32>
    %249 = arith.mulf %248, %246 : vector<8x128xf32>
    %250 = arith.addf %245, %249 : vector<8x128xf32>
    %c122_i32_176 = arith.constant 122 : i32
    %251 = tpu.dynamic_rotate %173 by %c122_i32_176 dim 1 : vector<8x128xf32>, i32 -> vector<8x128xf32>
    %c1_177 = arith.constant 1 : index
    %c15_178 = arith.constant 15 : index
    %c0_179 = arith.constant 0 : index
    %c0_180 = arith.constant 0 : index
    %252 = vector.load %arg3[%c1_177, %c15_178, %c0_179, %c0_180] : memref<2x25x8x128xf32, #tpu.memory_space<vmem>>, vector<1x1x8x128xf32>
    %253 = vector.shape_cast %252 : vector<1x1x8x128xf32> to vector<8x128xf32>
    %254 = arith.mulf %253, %251 : vector<8x128xf32>
    %255 = arith.addf %250, %254 : vector<8x128xf32>
    %c121_i32_181 = arith.constant 121 : i32
    %256 = tpu.dynamic_rotate %173 by %c121_i32_181 dim 1 : vector<8x128xf32>, i32 -> vector<8x128xf32>
    %c1_182 = arith.constant 1 : index
    %c16_183 = arith.constant 16 : index
    %c0_184 = arith.constant 0 : index
    %c0_185 = arith.constant 0 : index
    %257 = vector.load %arg3[%c1_182, %c16_183, %c0_184, %c0_185] : memref<2x25x8x128xf32, #tpu.memory_space<vmem>>, vector<1x1x8x128xf32>
    %258 = vector.shape_cast %257 : vector<1x1x8x128xf32> to vector<8x128xf32>
    %259 = arith.mulf %258, %256 : vector<8x128xf32>
    %260 = arith.addf %255, %259 : vector<8x128xf32>
    %c120_i32_186 = arith.constant 120 : i32
    %261 = tpu.dynamic_rotate %173 by %c120_i32_186 dim 1 : vector<8x128xf32>, i32 -> vector<8x128xf32>
    %c1_187 = arith.constant 1 : index
    %c17_188 = arith.constant 17 : index
    %c0_189 = arith.constant 0 : index
    %c0_190 = arith.constant 0 : index
    %262 = vector.load %arg3[%c1_187, %c17_188, %c0_189, %c0_190] : memref<2x25x8x128xf32, #tpu.memory_space<vmem>>, vector<1x1x8x128xf32>
    %263 = vector.shape_cast %262 : vector<1x1x8x128xf32> to vector<8x128xf32>
    %264 = arith.mulf %263, %261 : vector<8x128xf32>
    %265 = arith.addf %260, %264 : vector<8x128xf32>
    %c119_i32_191 = arith.constant 119 : i32
    %266 = tpu.dynamic_rotate %173 by %c119_i32_191 dim 1 : vector<8x128xf32>, i32 -> vector<8x128xf32>
    %c1_192 = arith.constant 1 : index
    %c18_193 = arith.constant 18 : index
    %c0_194 = arith.constant 0 : index
    %c0_195 = arith.constant 0 : index
    %267 = vector.load %arg3[%c1_192, %c18_193, %c0_194, %c0_195] : memref<2x25x8x128xf32, #tpu.memory_space<vmem>>, vector<1x1x8x128xf32>
    %268 = vector.shape_cast %267 : vector<1x1x8x128xf32> to vector<8x128xf32>
    %269 = arith.mulf %268, %266 : vector<8x128xf32>
    %270 = arith.addf %265, %269 : vector<8x128xf32>
    %c118_i32_196 = arith.constant 118 : i32
    %271 = tpu.dynamic_rotate %173 by %c118_i32_196 dim 1 : vector<8x128xf32>, i32 -> vector<8x128xf32>
    %c1_197 = arith.constant 1 : index
    %c19_198 = arith.constant 19 : index
    %c0_199 = arith.constant 0 : index
    %c0_200 = arith.constant 0 : index
    %272 = vector.load %arg3[%c1_197, %c19_198, %c0_199, %c0_200] : memref<2x25x8x128xf32, #tpu.memory_space<vmem>>, vector<1x1x8x128xf32>
    %273 = vector.shape_cast %272 : vector<1x1x8x128xf32> to vector<8x128xf32>
    %274 = arith.mulf %273, %271 : vector<8x128xf32>
    %275 = arith.addf %270, %274 : vector<8x128xf32>
    %c114_i32_201 = arith.constant 114 : i32
    %276 = tpu.dynamic_rotate %173 by %c114_i32_201 dim 1 : vector<8x128xf32>, i32 -> vector<8x128xf32>
    %c1_202 = arith.constant 1 : index
    %c20_203 = arith.constant 20 : index
    %c0_204 = arith.constant 0 : index
    %c0_205 = arith.constant 0 : index
    %277 = vector.load %arg3[%c1_202, %c20_203, %c0_204, %c0_205] : memref<2x25x8x128xf32, #tpu.memory_space<vmem>>, vector<1x1x8x128xf32>
    %278 = vector.shape_cast %277 : vector<1x1x8x128xf32> to vector<8x128xf32>
    %279 = arith.mulf %278, %276 : vector<8x128xf32>
    %280 = arith.addf %275, %279 : vector<8x128xf32>
    %c113_i32_206 = arith.constant 113 : i32
    %281 = tpu.dynamic_rotate %173 by %c113_i32_206 dim 1 : vector<8x128xf32>, i32 -> vector<8x128xf32>
    %c1_207 = arith.constant 1 : index
    %c21_208 = arith.constant 21 : index
    %c0_209 = arith.constant 0 : index
    %c0_210 = arith.constant 0 : index
    %282 = vector.load %arg3[%c1_207, %c21_208, %c0_209, %c0_210] : memref<2x25x8x128xf32, #tpu.memory_space<vmem>>, vector<1x1x8x128xf32>
    %283 = vector.shape_cast %282 : vector<1x1x8x128xf32> to vector<8x128xf32>
    %284 = arith.mulf %283, %281 : vector<8x128xf32>
    %285 = arith.addf %280, %284 : vector<8x128xf32>
    %c112_i32_211 = arith.constant 112 : i32
    %286 = tpu.dynamic_rotate %173 by %c112_i32_211 dim 1 : vector<8x128xf32>, i32 -> vector<8x128xf32>
    %c1_212 = arith.constant 1 : index
    %c22_213 = arith.constant 22 : index
    %c0_214 = arith.constant 0 : index
    %c0_215 = arith.constant 0 : index
    %287 = vector.load %arg3[%c1_212, %c22_213, %c0_214, %c0_215] : memref<2x25x8x128xf32, #tpu.memory_space<vmem>>, vector<1x1x8x128xf32>
    %288 = vector.shape_cast %287 : vector<1x1x8x128xf32> to vector<8x128xf32>
    %289 = arith.mulf %288, %286 : vector<8x128xf32>
    %290 = arith.addf %285, %289 : vector<8x128xf32>
    %c111_i32_216 = arith.constant 111 : i32
    %291 = tpu.dynamic_rotate %173 by %c111_i32_216 dim 1 : vector<8x128xf32>, i32 -> vector<8x128xf32>
    %c1_217 = arith.constant 1 : index
    %c23_218 = arith.constant 23 : index
    %c0_219 = arith.constant 0 : index
    %c0_220 = arith.constant 0 : index
    %292 = vector.load %arg3[%c1_217, %c23_218, %c0_219, %c0_220] : memref<2x25x8x128xf32, #tpu.memory_space<vmem>>, vector<1x1x8x128xf32>
    %293 = vector.shape_cast %292 : vector<1x1x8x128xf32> to vector<8x128xf32>
    %294 = arith.mulf %293, %291 : vector<8x128xf32>
    %295 = arith.addf %290, %294 : vector<8x128xf32>
    %c110_i32_221 = arith.constant 110 : i32
    %296 = tpu.dynamic_rotate %173 by %c110_i32_221 dim 1 : vector<8x128xf32>, i32 -> vector<8x128xf32>
    %c1_222 = arith.constant 1 : index
    %c24_223 = arith.constant 24 : index
    %c0_224 = arith.constant 0 : index
    %c0_225 = arith.constant 0 : index
    %297 = vector.load %arg3[%c1_222, %c24_223, %c0_224, %c0_225] : memref<2x25x8x128xf32, #tpu.memory_space<vmem>>, vector<1x1x8x128xf32>
    %298 = vector.shape_cast %297 : vector<1x1x8x128xf32> to vector<8x128xf32>
    %299 = arith.mulf %298, %296 : vector<8x128xf32>
    %300 = arith.addf %295, %299 : vector<8x128xf32>
    %c1_226 = arith.constant 1 : index
    %c0_227 = arith.constant 0 : index
    %c0_228 = arith.constant 0 : index
    %301 = vector.load %arg4[%c1_226, %c0_227, %c0_228] : memref<2x8x1xf32, #tpu.memory_space<vmem>>, vector<1x8x1xf32>
    %302 = vector.shape_cast %301 : vector<1x8x1xf32> to vector<8x1xf32>
    %303 = vector.broadcast %302 : vector<8x1xf32> to vector<8x128xf32>
    %304 = arith.addf %300, %303 : vector<8x128xf32>
    %305 = arith.truncf %304 : vector<8x128xf32> to vector<8x128xbf16>
    %306 = arith.truncf %174 : vector<8x128xf32> to vector<8x128xbf16>
    %cst_229 = arith.constant dense<0.000000e+00> : vector<128x128xf32>
    %307 = tpu.matmul %305, %306, %cst_229 {dimension_numbers = #tpu.dot_dimension_numbers<[0], [0], [1], [1], [0, 1, 1, 1], [], []>} : vector<8x128xbf16>, vector<8x128xbf16>, vector<128x128xf32> -> vector<128x128xf32>
    %c1_230 = arith.constant 1 : index
    %c0_231 = arith.constant 0 : index
    %c0_232 = arith.constant 0 : index
    %308 = vector.load %arg5[%c1_230, %c0_231, %c0_232] : memref<2x128x128xf32, #tpu.memory_space<vmem>>, vector<1x128x128xf32>
    %309 = vector.shape_cast %308 : vector<1x128x128xf32> to vector<128x128xf32>
    %310 = arith.addf %307, %309 : vector<128x128xf32>
    %cst_233 = arith.constant dense<0xFF800000> : vector<128xf32>
    %311 = vector.multi_reduction <maximumf>, %310, %cst_233 [1] : vector<128x128xf32> to vector<128xf32>
    %312 = vector.shape_cast %311 : vector<128xf32> to vector<128x1xf32>
    %313 = vector.broadcast %312 : vector<128x1xf32> to vector<128x128xf32>
    %314 = arith.subf %310, %313 : vector<128x128xf32>
    %315 = math.exp %314 : vector<128x128xf32>
    %cst_234 = arith.constant dense<0.000000e+00> : vector<128xf32>
    %316 = vector.multi_reduction <add>, %315, %cst_234 [1] : vector<128x128xf32> to vector<128xf32>
    %317 = vector.shape_cast %316 : vector<128xf32> to vector<128x1xf32>
    %318 = tpu.reciprocal %317 {approx = true} : vector<128x1xf32> -> vector<128x1xf32>
    %319 = vector.broadcast %318 : vector<128x1xf32> to vector<128x128xf32>
    %320 = arith.mulf %315, %319 : vector<128x128xf32>
    %321 = arith.truncf %175 : vector<16x128xf32> to vector<16x128xbf16>
    %322 = arith.truncf %320 : vector<128x128xf32> to vector<128x128xbf16>
    %cst_235 = arith.constant dense<0.000000e+00> : vector<16x128xf32>
    %323 = tpu.matmul %321, %322, %cst_235 {dimension_numbers = #tpu.dot_dimension_numbers<[1], [1], [0], [0], [0, 0, 1, 0], [], []>} : vector<16x128xbf16>, vector<128x128xbf16>, vector<16x128xf32> -> vector<16x128xf32>
    %324 = tpu.concatenate %161, %323 in 0 : vector<16x128xf32>, vector<16x128xf32> -> vector<32x128xf32>
    %cst_236 = arith.constant 0.000000e+00 : f32
    %325 = vector.broadcast %cst_236 : f32 to vector<32x128xf32>
    %326 = arith.maximumf %324, %325 : vector<32x128xf32>
    %c0_237 = arith.constant 0 : index
    %c0_238 = arith.constant 0 : index
    %327 = vector.load %arg6[%c0_237, %c0_238] : memref<32x32xf32, #tpu.memory_space<vmem>>, vector<32x32xf32>
    %328 = arith.truncf %327 : vector<32x32xf32> to vector<32x32xbf16>
    %329 = arith.truncf %326 : vector<32x128xf32> to vector<32x128xbf16>
    %cst_239 = arith.constant dense<0.000000e+00> : vector<32x128xf32>
    %330 = tpu.matmul %328, %329, %cst_239 {dimension_numbers = #tpu.dot_dimension_numbers<[1], [0], [0], [1], [0, 0, 1, 1], [], []>} : vector<32x32xbf16>, vector<32x128xbf16>, vector<32x128xf32> -> vector<32x128xf32>
    %c0_240 = arith.constant 0 : index
    %c0_241 = arith.constant 0 : index
    %331 = vector.load %arg7[%c0_240, %c0_241] : memref<32x1xf32, #tpu.memory_space<vmem>>, vector<32x1xf32>
    %332 = vector.broadcast %331 : vector<32x1xf32> to vector<32x128xf32>
    %333 = arith.addf %330, %332 : vector<32x128xf32>
    %c0_242 = arith.constant 0 : index
    %c0_243 = arith.constant 0 : index
    %334 = vector.load %arg8[%c0_242, %c0_243] : memref<32x128xf32, #tpu.memory_space<vmem>>, vector<32x128xf32>
    tpu.vector_store %arg8[%c0_242, %c0_243], %333 {strides = array<i32>} : memref<32x128xf32, #tpu.memory_space<vmem>>, vector<32x128xf32>,
    return
  }
}

</mosaic_0001>

<llo_original>
// kernel: cascaded_group_attention.1
$region0: #{cascaded_group_attention.1}
  #allocation0 [shape = 'u32[]', space=smem, size = 0x4, offset = 0x4, fixed_abs, tag = 'smem constant byte address 0x4 - core index']
  #allocation1 [shape = 'u32[144,128]{1,0:T(1,128)}', space=vmem, size = 0x12000, scoped, tag = 'internal scratch']
  %s0 = inlined_call_operand.vmem [shape: f32[32,128], index: 0, kind: input, shape index: {}]
  %s1 = inlined_call_operand.vmem [shape: f32[2,32,16], index: 1, kind: input, shape index: {}]
  %s2 = inlined_call_operand.vmem [shape: f32[2,32,1], index: 2, kind: input, shape index: {}]
  %s3 = inlined_call_operand.vmem [shape: f32[2,25,8,128], index: 3, kind: input, shape index: {}]
  %s4 = inlined_call_operand.vmem [shape: f32[2,8,1], index: 4, kind: input, shape index: {}]
  %s5 = inlined_call_operand.hbm [shape: f32[2,128,128], index: 5, kind: input, shape index: {}]
  %s6 = inlined_call_operand.vmem [shape: f32[32,32], index: 6, kind: input, shape index: {}]
  %s7 = inlined_call_operand.vmem [shape: f32[32,1], index: 7, kind: input, shape index: {}]
  %s8 = inlined_call_operand.vmem [shape: f32[32,128], index: 8, kind: output, shape index: {}]
  %s9 = sld [smem:[#allocation0]]
  $region46: #{cascaded_group_attention.1} parent=0
    _
  %s11 = ssub.s32 1, %s9
  %s12 = scalar_select 0, %s11, %s9
  $region1: #{cascaded_group_attention.1} parent=0
    #allocation2 [shape = 'u8[131072]{0}', space=vmem, size = 0x20000, scoped, tag = 'input window, operand 5, single buffered']
    #allocation3 [shape = 's32[1]{0}', space=sflag, size = 0x4, scoped, tag = 'scoped memory for cascaded_group_attention.1']
    %13 = vsyncpa [#allocation3], 0
    // Predicated region
    $region2: #{cascaded_group_attention.1} parent=1 // pred_check
      _
    $region3: #{cascaded_group_attention.1} parent=1 // pred_check_branch
      %15 = sbr.rel (0) target = $region5
    $region4: #{cascaded_group_attention.1} parent=1 // pred_region
      _
    $region5: #{cascaded_group_attention.1} parent=1 // pred_fallthru
      _
    // Predicated region
    $region6: #{cascaded_group_attention.1} parent=1 // pred_check
      _
    $region7: #{cascaded_group_attention.1} parent=1 // pred_check_branch
      %17 = sbr.rel (0) target = $region9
    $region8: #{cascaded_group_attention.1} parent=1 // pred_region
      _
    $region9: #{cascaded_group_attention.1} parent=1 // pred_fallthru
      _
    // Predicated region
    $region10: #{cascaded_group_attention.1} parent=1 // pred_check
      _
    $region11: #{cascaded_group_attention.1} parent=1 // pred_check_branch
      %19 = sbr.rel (0) target = $region13
    $region12: #{cascaded_group_attention.1} parent=1 // pred_region
      _
    $region13: #{cascaded_group_attention.1} parent=1 // pred_fallthru
      _
    // Predicated region
    $region14: #{cascaded_group_attention.1} parent=1 // pred_check
      _
    $region15: #{cascaded_group_attention.1} parent=1 // pred_check_branch
      %21 = sbr.rel (0) target = $region17
    $region16: #{cascaded_group_attention.1} parent=1 // pred_region
      _
    $region17: #{cascaded_group_attention.1} parent=1 // pred_fallthru
      _
    // Predicated region
    $region18: #{cascaded_group_attention.1} parent=1 // pred_check
      _
    $region19: #{cascaded_group_attention.1} parent=1 // pred_check_branch
      %23 = sbr.rel (0) target = $region21
    $region20: #{cascaded_group_attention.1} parent=1 // pred_region
      _
    $region21: #{cascaded_group_attention.1} parent=1 // pred_fallthru
      _
    // Predicated region
    $region22: #{cascaded_group_attention.1} parent=1 // pred_check
      _
    $region23: #{cascaded_group_attention.1} parent=1 // pred_check_branch
      %25 = sbr.rel (0) target = $region25
    $region24: #{cascaded_group_attention.1} parent=1 // pred_region
      %s27 = ssub.s32 4096, 4096
      %28 = vsyncadd [#allocation3], %s27
      %s29 = sshll.u32 [#allocation2], 4
      %s30 = int_to_ptr.vmem [resolvable:$true] %s29
      %35 = dma.hbm_to_vmem [thread:$0]  %s5, 4096, %s30, [#allocation3], 128, 128, 8
    $region25: #{cascaded_group_attention.1} parent=1 // pred_fallthru
      _
    // Predicated region
    $region26: #{cascaded_group_attention.1} parent=1 // pred_check
      _
    $region27: #{cascaded_group_attention.1} parent=1 // pred_check_branch
      %37 = sbr.rel (0) target = $region29
    $region28: #{cascaded_group_attention.1} parent=1 // pred_region
      _
    $region29: #{cascaded_group_attention.1} parent=1 // pred_fallthru
      _
    // Predicated region
    $region30: #{cascaded_group_attention.1} parent=1 // pred_check
      _
    $region31: #{cascaded_group_attention.1} parent=1 // pred_check_branch
      %39 = sbr.rel (0) target = $region33
    $region32: #{cascaded_group_attention.1} parent=1 // pred_region
      _
    $region33: #{cascaded_group_attention.1} parent=1 // pred_fallthru
      _
    // Predicated region
    $region34: #{cascaded_group_attention.1} parent=1 // pred_check
      _
    $region35: #{cascaded_group_attention.1} parent=1 // pred_check_branch
      %41 = sbr.rel (0) target = $region37
    $region36: #{cascaded_group_attention.1} parent=1 // pred_region
      %42 = dma.done [#allocation3], 4096
    $region37: #{cascaded_group_attention.1} parent=1 // pred_fallthru
      _
    %v44 = vld [vmem:[%s0] sm:$0xff]
    %v45 = vld [vmem:[%s0 + $0x8] sm:$0xff]
    %v46 = vld [vmem:[%s0 + $0x10] sm:$0xff]
    %v47 = vld [vmem:[%s0 + $0x18] sm:$0xff]
    %v48 = vld [vmem:[%s1] sm:$0xff]
    %v49 = vld [vmem:[%s1 + $0x8] sm:$0xff]
    %v50 = vld [vmem:[%s1 + $0x10] sm:$0xff]
    %v51 = vld [vmem:[%s1 + $0x18] sm:$0xff]
    %v52 = vpack.c.bf16 %v49, %v48
    %v53 = vpack.c.bf16 %v51, %v50
    %v54 = vpack.c.bf16 %v45, %v44
    %v55 = vld [vmem:[%s2] sm:$0xff]
    %v56 = vld [vmem:[%s2 + $0x8] sm:$0xff]
    %v57 = vld [vmem:[%s2 + $0x10] sm:$0xff]
    %v58 = vld [vmem:[%s2 + $0x18] sm:$0xff]
    %60 = vset.pattern.permute.xlu0 0
    %61 = vperm.xlu0 %60, %v55
    %v62 = vpop.permute.xlu0 %61
    %65 = vset.pattern.permute.xlu0 0
    %66 = vperm.xlu0 %65, %v56
    %v67 = vpop.permute.xlu0 %66
    %70 = vset.pattern.permute.xlu0 0
    %71 = vperm.xlu0 %70, %v57
    %v72 = vpop.permute.xlu0 %71
    %75 = vset.pattern.permute.xlu0 0
    %76 = vperm.xlu0 %75, %v58
    %v77 = vpop.permute.xlu0 %76
    %vm79 = vcmask 130048
    %v81 = vsel %vm79, %v52, 0
    %v84 = vsel %vm79, %v53, 0
    %86 = vmatprep.subr.bf16.mxu0 0
    %87 = vmatpush1.bf16.msra.mxu0 %v54
    %88 = vmatprep.subr.bf16.mxu0 0
    %89 = vmatpush1.bf16.msra.mxu0 0
    %90 = vmatprep.subr.bf16.mxu0 0
    %91 = vmatpush1.bf16.msra.mxu0 0
    %92 = vmatprep.subr.bf16.mxu0 0
    %93 = vmatpush1.bf16.msra.mxu0 0
    %94 = vmatprep.subr.bf16.mxu0 0
    %95 = vmatpush1.bf16.msra.mxu0 0
    %96 = vmatprep.subr.bf16.mxu0 0
    %97 = vmatpush1.bf16.msra.mxu0 0
    %98 = vmatprep.subr.bf16.mxu0 0
    %99 = vmatpush1.bf16.msra.mxu0 0
    %100 = vmatprep.subr.bf16.mxu0 0
    %101 = vmatpush1.bf16.msra.mxu0 0
    %102 = vmatprep.subr.bf16.mxu0 0
    %103 = vmatpush1.bf16.msra.mxu0 0
    %104 = vmatprep.subr.bf16.mxu0 0
    %105 = vmatpush1.bf16.msra.mxu0 0
    %106 = vmatprep.subr.bf16.mxu0 0
    %107 = vmatpush1.bf16.msra.mxu0 0
    %108 = vmatprep.subr.bf16.mxu0 0
    %109 = vmatpush1.bf16.msra.mxu0 0
    %110 = vmatprep.subr.bf16.mxu0 0
    %111 = vmatpush1.bf16.msra.mxu0 0
    %112 = vmatprep.subr.bf16.mxu0 0
    %113 = vmatpush1.bf16.msra.mxu0 0
    %114 = vmatprep.subr.bf16.mxu0 0
    %115 = vmatpush1.bf16.msra.mxu0 0
    %116 = vmatprep.subr.bf16.mxu0 0
    %117 = vmatpush1.bf16.msra.mxu0 0
    %118 = vmatprep.mubr.bf16.mxu0 0
    %119 = vmatmul.mubr.bf16.gmra.mrb[0].mxu0 %v81
    %v120 = vpop.f32.mrb[0].mxu0
    %v121 = vadd.f32 %v62, %v120
    %v122 = vpop.f32.mrb[0].mxu0
    %v123 = vpop.f32.mrb[0].mxu0
    %v124 = vadd.f32 %v67, %v123
    %v125 = vpop.f32.mrb[0].mxu0
    %126 = vmatprep.mubr.bf16.mxu0 0
    %127 = vmatmul.mubr.bf16.gmra.mrb[0].mxu0 %v84
    %v128 = vpop.f32.mrb[0].mxu0
    %v129 = vadd.f32 %v72, %v128
    %v130 = vpop.f32.mrb[0].mxu0
    %v131 = vpop.f32.mrb[0].mxu0
    %v132 = vadd.f32 %v77, %v131
    %v133 = vpop.f32.mrb[0].mxu0
    %134 = vdwg.mxu0
    %135 = vrot.lane.b32.xlu0 %v121, 18
    %v136 = vpop.permute.xlu0 %135
    %v137 = vld [vmem:[%s3] sm:$0xff]
    %v138 = vmul.f32 %v137, %v136
    %v139 = vadd.f32 %v138, 0.0
    %140 = vrot.lane.b32.xlu0 %v121, 17
    %v141 = vpop.permute.xlu0 %140
    %s142 = scalar_lea.vmem %s3, 8
    %v143 = vld [vmem:[%s142] sm:$0xff]
    %v144 = vmul.f32 %v143, %v141
    %v145 = vadd.f32 %v139, %v144
    %146 = vrot.lane.b32.xlu0 %v121, 16
    %v147 = vpop.permute.xlu0 %146
    %s148 = scalar_lea.vmem %s3, 16
    %v149 = vld [vmem:[%s148] sm:$0xff]
    %v150 = vmul.f32 %v149, %v147
    %v151 = vadd.f32 %v145, %v150
    %152 = vrot.lane.b32.xlu0 %v121, 15
    %v153 = vpop.permute.xlu0 %152
    %s154 = scalar_lea.vmem %s3, 24
    %v155 = vld [vmem:[%s154] sm:$0xff]
    %v156 = vmul.f32 %v155, %v153
    %v157 = vadd.f32 %v151, %v156
    %158 = vrot.lane.b32.xlu0 %v121, 14
    %v159 = vpop.permute.xlu0 %158
    %s160 = scalar_lea.vmem %s3, 32
    %v161 = vld [vmem:[%s160] sm:$0xff]
    %v162 = vmul.f32 %v161, %v159
    %v163 = vadd.f32 %v157, %v162
    %164 = vrot.lane.b32.xlu0 %v121, 10
    %v165 = vpop.permute.xlu0 %164
    %s166 = scalar_lea.vmem %s3, 40
    %v167 = vld [vmem:[%s166] sm:$0xff]
    %v168 = vmul.f32 %v167, %v165
    %v169 = vadd.f32 %v163, %v168
    %170 = vrot.lane.b32.xlu0 %v121, 9
    %v171 = vpop.permute.xlu0 %170
    %s172 = scalar_lea.vmem %s3, 48
    %v173 = vld [vmem:[%s172] sm:$0xff]
    %v174 = vmul.f32 %v173, %v171
    %v175 = vadd.f32 %v169, %v174
    %176 = vrot.lane.b32.xlu0 %v121, 8
    %v177 = vpop.permute.xlu0 %176
    %s178 = scalar_lea.vmem %s3, 56
    %v179 = vld [vmem:[%s178] sm:$0xff]
    %v180 = vmul.f32 %v179, %v177
    %v181 = vadd.f32 %v175, %v180
    %182 = vrot.lane.b32.xlu0 %v121, 7
    %v183 = vpop.permute.xlu0 %182
    %s184 = scalar_lea.vmem %s3, 64
    %v185 = vld [vmem:[%s184] sm:$0xff]
    %v186 = vmul.f32 %v185, %v183
    %v187 = vadd.f32 %v181, %v186
    %188 = vrot.lane.b32.xlu0 %v121, 6
    %v189 = vpop.permute.xlu0 %188
    %s190 = scalar_lea.vmem %s3, 72
    %v191 = vld [vmem:[%s190] sm:$0xff]
    %v192 = vmul.f32 %v191, %v189
    %v193 = vadd.f32 %v187, %v192
    %194 = vrot.lane.b32.xlu0 %v121, 2
    %v195 = vpop.permute.xlu0 %194
    %s196 = scalar_lea.vmem %s3, 80
    %v197 = vld [vmem:[%s196] sm:$0xff]
    %v198 = vmul.f32 %v197, %v195
    %v199 = vadd.f32 %v193, %v198
    %200 = vrot.lane.b32.xlu0 %v121, 1
    %v201 = vpop.permute.xlu0 %200
    %s202 = scalar_lea.vmem %s3, 88
    %v203 = vld [vmem:[%s202] sm:$0xff]
    %v204 = vmul.f32 %v203, %v201
    %v205 = vadd.f32 %v199, %v204
    %s206 = scalar_lea.vmem %s3, 96
    %v207 = vld [vmem:[%s206] sm:$0xff]
    %v208 = vmul.f32 %v207, %v121
    %v209 = vadd.f32 %v205, %v208
    %210 = vrot.lane.b32.xlu0 %v121, 127
    %v211 = vpop.permute.xlu0 %210
    %s212 = scalar_lea.vmem %s3, 104
    %v213 = vld [vmem:[%s212] sm:$0xff]
    %v214 = vmul.f32 %v213, %v211
    %v215 = vadd.f32 %v209, %v214
    %216 = vrot.lane.b32.xlu0 %v121, 126
    %v217 = vpop.permute.xlu0 %216
    %s218 = scalar_lea.vmem %s3, 112
    %v219 = vld [vmem:[%s218] sm:$0xff]
    %v220 = vmul.f32 %v219, %v217
    %v221 = vadd.f32 %v215, %v220
    %222 = vrot.lane.b32.xlu0 %v121, 122
    %v223 = vpop.permute.xlu0 %222
    %s224 = scalar_lea.vmem %s3, 120
    %v225 = vld [vmem:[%s224] sm:$0xff]
    %v226 = vmul.f32 %v225, %v223
    %v227 = vadd.f32 %v221, %v226
    %228 = vrot.lane.b32.xlu0 %v121, 121
    %v229 = vpop.permute.xlu0 %228
    %s230 = scalar_lea.vmem %s3, 128
    %v231 = vld [vmem:[%s230] sm:$0xff]
    %v232 = vmul.f32 %v231, %v229
    %v233 = vadd.f32 %v227, %v232
    %234 = vrot.lane.b32.xlu0 %v121, 120
    %v235 = vpop.permute.xlu0 %234
    %s236 = scalar_lea.vmem %s3, 136
    %v237 = vld [vmem:[%s236] sm:$0xff]
    %v238 = vmul.f32 %v237, %v235
    %v239 = vadd.f32 %v233, %v238
    %240 = vrot.lane.b32.xlu0 %v121, 119
    %v241 = vpop.permute.xlu0 %240
    %s242 = scalar_lea.vmem %s3, 144
    %v243 = vld [vmem:[%s242] sm:$0xff]
    %v244 = vmul.f32 %v243, %v241
    %v245 = vadd.f32 %v239, %v244
    %246 = vrot.lane.b32.xlu0 %v121, 118
    %v247 = vpop.permute.xlu0 %246
    %s248 = scalar_lea.vmem %s3, 152
    %v249 = vld [vmem:[%s248] sm:$0xff]
    %v250 = vmul.f32 %v249, %v247
    %v251 = vadd.f32 %v245, %v250
    %252 = vrot.lane.b32.xlu0 %v121, 114
    %v253 = vpop.permute.xlu0 %252
    %s254 = scalar_lea.vmem %s3, 160
    %v255 = vld [vmem:[%s254] sm:$0xff]
    %v256 = vmul.f32 %v255, %v253
    %v257 = vadd.f32 %v251, %v256
    %258 = vrot.lane.b32.xlu0 %v121, 113
    %v259 = vpop.permute.xlu0 %258
    %s260 = scalar_lea.vmem %s3, 168
    %v261 = vld [vmem:[%s260] sm:$0xff]
    %v262 = vmul.f32 %v261, %v259
    %v263 = vadd.f32 %v257, %v262
    %264 = vrot.lane.b32.xlu0 %v121, 112
    %v265 = vpop.permute.xlu0 %264
    %s266 = scalar_lea.vmem %s3, 176
    %v267 = vld [vmem:[%s266] sm:$0xff]
    %v268 = vmul.f32 %v267, %v265
    %v269 = vadd.f32 %v263, %v268
    %270 = vrot.lane.b32.xlu0 %v121, 111
    %v271 = vpop.permute.xlu0 %270
    %s272 = scalar_lea.vmem %s3, 184
    %v273 = vld [vmem:[%s272] sm:$0xff]
    %v274 = vmul.f32 %v273, %v271
    %v275 = vadd.f32 %v269, %v274
    %276 = vrot.lane.b32.xlu0 %v121, 110
    %v277 = vpop.permute.xlu0 %276
    %s278 = scalar_lea.vmem %s3, 192
    %v279 = vld [vmem:[%s278] sm:$0xff]
    %v280 = vmul.f32 %v279, %v277
    %v281 = vadd.f32 %v275, %v280
    %v282 = vld [vmem:[%s4] sm:$0xff]
    %284 = vset.pattern.permute.xlu0 0
    %285 = vperm.xlu0 %284, %v282
    %v286 = vpop.permute.xlu0 %285
    %v288 = vadd.f32 %v281, %v286
    %v289 = vpack.c.bf16 %v288, %v288
    %v290 = vpack.c.bf16 %v124, %v124
    %v291 = vld [vmem:[#allocation2] sm:$0xff]
    %v292 = vld [vmem:[#allocation2 + $0x8] sm:$0xff]
    %v293 = vld [vmem:[#allocation2 + $0x10] sm:$0xff]
    %v294 = vld [vmem:[#allocation2 + $0x18] sm:$0xff]
    %v295 = vld [vmem:[#allocation2 + $0x20] sm:$0xff]
    %v296 = vld [vmem:[#allocation2 + $0x28] sm:$0xff]
    %v297 = vld [vmem:[#allocation2 + $0x30] sm:$0xff]
    %v298 = vld [vmem:[#allocation2 + $0x38] sm:$0xff]
    %v299 = vld [vmem:[#allocation2 + $0x40] sm:$0xff]
    %v300 = vld [vmem:[#allocation2 + $0x48] sm:$0xff]
    %v301 = vld [vmem:[#allocation2 + $0x50] sm:$0xff]
    %v302 = vld [vmem:[#allocation2 + $0x58] sm:$0xff]
    %v303 = vld [vmem:[#allocation2 + $0x60] sm:$0xff]
    %v304 = vld [vmem:[#allocation2 + $0x68] sm:$0xff]
    %v305 = vld [vmem:[#allocation2 + $0x70] sm:$0xff]
    %v306 = vld [vmem:[#allocation2 + $0x78] sm:$0xff]
    %307 = vxpose.xlu0.c.b16.start [1/8] %v289, 128
    %308 = vxpose.xlu0.c.b16.cont [2/8] 0, 128
    %309 = vxpose.xlu0.c.b16.cont [3/8] 0, 128
    %310 = vxpose.xlu0.c.b16.cont [4/8] 0, 128
    %311 = vxpose.xlu0.c.b16.cont [5/8] 0, 128
    %312 = vxpose.xlu0.c.b16.cont [6/8] 0, 128
    %313 = vxpose.xlu0.c.b16.cont [7/8] 0, 128
    %314 = vxpose.xlu0.c.b16.end [8/8] 0, 128
    %v315 = vpop.trf.xlu0
    %v316 = vpop.trf.xlu0
    %v317 = vpop.trf.xlu0
    %v318 = vpop.trf.xlu0
    %v319 = vpop.trf.xlu0
    %v320 = vpop.trf.xlu0
    %v321 = vpop.trf.xlu0
    %v322 = vpop.trf.xlu0
    %vm323 = vcmask 64512
    %v325 = vsel %vm323, %v315, 0
    %v328 = vsel %vm323, %v316, 0
    %v331 = vsel %vm323, %v317, 0
    %v334 = vsel %vm323, %v318, 0
    %v337 = vsel %vm323, %v319, 0
    %v340 = vsel %vm323, %v320, 0
    %v343 = vsel %vm323, %v321, 0
    %v346 = vsel %vm323, %v322, 0
    %vm348 = vcmask 1043456
    %v350 = vsel %vm348, %v290, 0
    %352 = vmatprep.subr.bf16.mxu0 0
    %353 = vmatpush1.bf16.msra.mxu0 %v350
    %354 = vmatprep.subr.bf16.mxu0 0
    %355 = vmatpush1.bf16.msra.mxu0 0
    %356 = vmatprep.subr.bf16.mxu0 0
    %357 = vmatpush1.bf16.msra.mxu0 0
    %358 = vmatprep.subr.bf16.mxu0 0
    %359 = vmatpush1.bf16.msra.mxu0 0
    %360 = vmatprep.subr.bf16.mxu0 0
    %361 = vmatpush1.bf16.msra.mxu0 0
    %362 = vmatprep.subr.bf16.mxu0 0
    %363 = vmatpush1.bf16.msra.mxu0 0
    %364 = vmatprep.subr.bf16.mxu0 0
    %365 = vmatpush1.bf16.msra.mxu0 0
    %366 = vmatprep.subr.bf16.mxu0 0
    %367 = vmatpush1.bf16.msra.mxu0 0
    %368 = vmatprep.subr.bf16.mxu0 0
    %369 = vmatpush1.bf16.msra.mxu0 0
    %370 = vmatprep.subr.bf16.mxu0 0
    %371 = vmatpush1.bf16.msra.mxu0 0
    %372 = vmatprep.subr.bf16.mxu0 0
    %373 = vmatpush1.bf16.msra.mxu0 0
    %374 = vmatprep.subr.bf16.mxu0 0
    %375 = vmatpush1.bf16.msra.mxu0 0
    %376 = vmatprep.subr.bf16.mxu0 0
    %377 = vmatpush1.bf16.msra.mxu0 0
    %378 = vmatprep.subr.bf16.mxu0 0
    %379 = vmatpush1.bf16.msra.mxu0 0
    %380 = vmatprep.subr.bf16.mxu0 0
    %381 = vmatpush1.bf16.msra.mxu0 0
    %382 = vmatprep.subr.bf16.mxu0 0
    %383 = vmatpush1.bf16.msra.mxu0 0
    %384 = vmatprep.mubr.bf16.mxu0 0
    %385 = vmatmul.mubr.bf16.gmra.mrb[0].mxu0 %v325
    %v386 = vpop.f32.mrb[0].mxu0
    %v387 = vadd.f32 %v291, %v386
    %v388 = vpop.f32.mrb[0].mxu0
    %v389 = vpop.f32.mrb[0].mxu0
    %v390 = vadd.f32 %v292, %v389
    %v391 = vpop.f32.mrb[0].mxu0
    %392 = vmatprep.mubr.bf16.mxu0 0
    %393 = vmatmul.mubr.bf16.gmra.mrb[0].mxu0 %v328
    %v394 = vpop.f32.mrb[0].mxu0
    %v395 = vadd.f32 %v293, %v394
    %v396 = vpop.f32.mrb[0].mxu0
    %v397 = vpop.f32.mrb[0].mxu0
    %v398 = vadd.f32 %v294, %v397
    %v399 = vpop.f32.mrb[0].mxu0
    %400 = vmatprep.mubr.bf16.mxu0 0
    %401 = vmatmul.mubr.bf16.gmra.mrb[0].mxu0 %v331
    %v402 = vpop.f32.mrb[0].mxu0
    %v403 = vadd.f32 %v295, %v402
    %v404 = vpop.f32.mrb[0].mxu0
    %v405 = vpop.f32.mrb[0].mxu0
    %v406 = vadd.f32 %v296, %v405
    %v407 = vpop.f32.mrb[0].mxu0
    %408 = vmatprep.mubr.bf16.mxu0 0
    %409 = vmatmul.mubr.bf16.gmra.mrb[0].mxu0 %v334
    %v410 = vpop.f32.mrb[0].mxu0
    %v411 = vadd.f32 %v297, %v410
    %v412 = vpop.f32.mrb[0].mxu0
    %v413 = vpop.f32.mrb[0].mxu0
    %v414 = vadd.f32 %v298, %v413
    %v415 = vpop.f32.mrb[0].mxu0
    %416 = vmatprep.mubr.bf16.mxu0 0
    %417 = vmatmul.mubr.bf16.gmra.mrb[0].mxu0 %v337
    %v418 = vpop.f32.mrb[0].mxu0
    %v419 = vadd.f32 %v299, %v418
    %v420 = vpop.f32.mrb[0].mxu0
    %v421 = vpop.f32.mrb[0].mxu0
    %v422 = vadd.f32 %v300, %v421
    %v423 = vpop.f32.mrb[0].mxu0
    %424 = vmatprep.mubr.bf16.mxu0 0
    %425 = vmatmul.mubr.bf16.gmra.mrb[0].mxu0 %v340
    %v426 = vpop.f32.mrb[0].mxu0
    %v427 = vadd.f32 %v301, %v426
    %v428 = vpop.f32.mrb[0].mxu0
    %v429 = vpop.f32.mrb[0].mxu0
    %v430 = vadd.f32 %v302, %v429
    %v431 = vpop.f32.mrb[0].mxu0
    %432 = vmatprep.mubr.bf16.mxu0 0
    %433 = vmatmul.mubr.bf16.gmra.mrb[0].mxu0 %v343
    %v434 = vpop.f32.mrb[0].mxu0
    %v435 = vadd.f32 %v303, %v434
    %v436 = vpop.f32.mrb[0].mxu0
    %v437 = vpop.f32.mrb[0].mxu0
    %v438 = vadd.f32 %v304, %v437
    %v439 = vpop.f32.mrb[0].mxu0
    %440 = vmatprep.mubr.bf16.mxu0 0
    %441 = vmatmul.mubr.bf16.gmra.mrb[0].mxu0 %v346
    %v442 = vpop.f32.mrb[0].mxu0
    %v443 = vadd.f32 %v305, %v442
    %v444 = vpop.f32.mrb[0].mxu0
    %v445 = vpop.f32.mrb[0].mxu0
    %v446 = vadd.f32 %v306, %v445
    %v447 = vpop.f32.mrb[0].mxu0
    %448 = vdwg.mxu0
    %449 = vmax.xlane.f32.xlu0 %v387
    %v450 = vpop.xlane.xlu0 %449
    %451 = vmax.xlane.f32.xlu0 %v390
    %v452 = vpop.xlane.xlu0 %451
    %453 = vmax.xlane.f32.xlu0 %v395
    %v454 = vpop.xlane.xlu0 %453
    %455 = vmax.xlane.f32.xlu0 %v398
    %v456 = vpop.xlane.xlu0 %455
    %457 = vmax.xlane.f32.xlu0 %v403
    %v458 = vpop.xlane.xlu0 %457
    %459 = vmax.xlane.f32.xlu0 %v406
    %v460 = vpop.xlane.xlu0 %459
    %461 = vmax.xlane.f32.xlu0 %v411
    %v462 = vpop.xlane.xlu0 %461
    %463 = vmax.xlane.f32.xlu0 %v414
    %v464 = vpop.xlane.xlu0 %463
    %465 = vmax.xlane.f32.xlu0 %v419
    %v466 = vpop.xlane.xlu0 %465
    %467 = vmax.xlane.f32.xlu0 %v422
    %v468 = vpop.xlane.xlu0 %467
    %469 = vmax.xlane.f32.xlu0 %v427
    %v470 = vpop.xlane.xlu0 %469
    %471 = vmax.xlane.f32.xlu0 %v430
    %v472 = vpop.xlane.xlu0 %471
    %473 = vmax.xlane.f32.xlu0 %v435
    %v474 = vpop.xlane.xlu0 %473
    %475 = vmax.xlane.f32.xlu0 %v438
    %v476 = vpop.xlane.xlu0 %475
    %477 = vmax.xlane.f32.xlu0 %v443
    %v478 = vpop.xlane.xlu0 %477
    %479 = vmax.xlane.f32.xlu0 %v446
    %v480 = vpop.xlane.xlu0 %479
    %v481 = vsub.f32 %v387, %v450
    %v482 = vsub.f32 %v390, %v452
    %v483 = vsub.f32 %v395, %v454
    %v484 = vsub.f32 %v398, %v456
    %v485 = vsub.f32 %v403, %v458
    %v486 = vsub.f32 %v406, %v460
    %v487 = vsub.f32 %v411, %v462
    %v488 = vsub.f32 %v414, %v464
    %v489 = vsub.f32 %v419, %v466
    %v490 = vsub.f32 %v422, %v468
    %v491 = vsub.f32 %v427, %v470
    %v492 = vsub.f32 %v430, %v472
    %v493 = vsub.f32 %v435, %v474
    %v494 = vsub.f32 %v438, %v476
    %v495 = vsub.f32 %v443, %v478
    %v496 = vsub.f32 %v446, %v480
    %v497 = vmul.f32 %v481, 1.442695
    %v498 = vpow.pop %v497
    %v499 = vmul.f32 %v482, 1.442695
    %v500 = vpow.pop %v499
    %v501 = vmul.f32 %v483, 1.442695
    %v502 = vpow.pop %v501
    %v503 = vmul.f32 %v484, 1.442695
    %v504 = vpow.pop %v503
    %v505 = vmul.f32 %v485, 1.442695
    %v506 = vpow.pop %v505
    %v507 = vmul.f32 %v486, 1.442695
    %v508 = vpow.pop %v507
    %v509 = vmul.f32 %v487, 1.442695
    %v510 = vpow.pop %v509
    %v511 = vmul.f32 %v488, 1.442695
    %v512 = vpow.pop %v511
    %v513 = vmul.f32 %v489, 1.442695
    %v514 = vpow.pop %v513
    %v515 = vmul.f32 %v490, 1.442695
    %v516 = vpow.pop %v515
    %v517 = vmul.f32 %v491, 1.442695
    %v518 = vpow.pop %v517
    %v519 = vmul.f32 %v492, 1.442695
    %v520 = vpow.pop %v519
    %v521 = vmul.f32 %v493, 1.442695
    %v522 = vpow.pop %v521
    %v523 = vmul.f32 %v494, 1.442695
    %v524 = vpow.pop %v523
    %v525 = vmul.f32 %v495, 1.442695
    %v526 = vpow.pop %v525
    %v527 = vmul.f32 %v496, 1.442695
    %v528 = vpow.pop %v527
    %529 = vadd.xlane.f32.xlu0 %v498
    %v530 = vpop.xlane.xlu0 %529
    %531 = vadd.xlane.f32.xlu0 %v500
    %v532 = vpop.xlane.xlu0 %531
    %533 = vadd.xlane.f32.xlu0 %v502
    %v534 = vpop.xlane.xlu0 %533
    %535 = vadd.xlane.f32.xlu0 %v504
    %v536 = vpop.xlane.xlu0 %535
    %537 = vadd.xlane.f32.xlu0 %v506
    %v538 = vpop.xlane.xlu0 %537
    %539 = vadd.xlane.f32.xlu0 %v508
    %v540 = vpop.xlane.xlu0 %539
    %541 = vadd.xlane.f32.xlu0 %v510
    %v542 = vpop.xlane.xlu0 %541
    %543 = vadd.xlane.f32.xlu0 %v512
    %v544 = vpop.xlane.xlu0 %543
    %545 = vadd.xlane.f32.xlu0 %v514
    %v546 = vpop.xlane.xlu0 %545
    %547 = vadd.xlane.f32.xlu0 %v516
    %v548 = vpop.xlane.xlu0 %547
    %549 = vadd.xlane.f32.xlu0 %v518
    %v550 = vpop.xlane.xlu0 %549
    %551 = vadd.xlane.f32.xlu0 %v520
    %v552 = vpop.xlane.xlu0 %551
    %553 = vadd.xlane.f32.xlu0 %v522
    %v554 = vpop.xlane.xlu0 %553
    %555 = vadd.xlane.f32.xlu0 %v524
    %v556 = vpop.xlane.xlu0 %555
    %557 = vadd.xlane.f32.xlu0 %v526
    %v558 = vpop.xlane.xlu0 %557
    %559 = vadd.xlane.f32.xlu0 %v528
    %v560 = vpop.xlane.xlu0 %559
    %v561 = vrcp.pop %v530
    %v562 = vrcp.pop %v532
    %v563 = vrcp.pop %v534
    %v564 = vrcp.pop %v536
    %v565 = vrcp.pop %v538
    %v566 = vrcp.pop %v540
    %v567 = vrcp.pop %v542
    %v568 = vrcp.pop %v544
    %v569 = vrcp.pop %v546
    %v570 = vrcp.pop %v548
    %v571 = vrcp.pop %v550
    %v572 = vrcp.pop %v552
    %v573 = vrcp.pop %v554
    %v574 = vrcp.pop %v556
    %v575 = vrcp.pop %v558
    %v576 = vrcp.pop %v560
    %v577 = vmul.f32 %v498, %v561
    %v578 = vmul.f32 %v500, %v562
    %v579 = vmul.f32 %v502, %v563
    %v580 = vmul.f32 %v504, %v564
    %v581 = vmul.f32 %v506, %v565
    %v582 = vmul.f32 %v508, %v566
    %v583 = vmul.f32 %v510, %v567
    %v584 = vmul.f32 %v512, %v568
    %v585 = vmul.f32 %v514, %v569
    %v586 = vmul.f32 %v516, %v570
    %v587 = vmul.f32 %v518, %v571
    %v588 = vmul.f32 %v520, %v572
    %v589 = vmul.f32 %v522, %v573
    %v590 = vmul.f32 %v524, %v574
    %v591 = vmul.f32 %v526, %v575
    %v592 = vmul.f32 %v528, %v576
    %v593 = vpack.c.bf16 %v132, %v129
    %v594 = vpack.c.bf16 %v578, %v577
    %v595 = vpack.c.bf16 %v580, %v579
    %v596 = vpack.c.bf16 %v582, %v581
    %v597 = vpack.c.bf16 %v584, %v583
    %v598 = vpack.c.bf16 %v586, %v585
    %v599 = vpack.c.bf16 %v588, %v587
    %v600 = vpack.c.bf16 %v590, %v589
    %v601 = vpack.c.bf16 %v592, %v591
    %602 = vmatprep.subr.bf16.mxu0 0
    %603 = vmatpush1.bf16.xpose.msra.mxu0 %v594
    %604 = vmatprep.subr.bf16.mxu0 0
    %605 = vmatpush1.bf16.xpose.msra.mxu0 %v595
    %606 = vmatprep.subr.bf16.mxu0 0
    %607 = vmatpush1.bf16.xpose.msra.mxu0 %v596
    %608 = vmatprep.subr.bf16.mxu0 0
    %609 = vmatpush1.bf16.xpose.msra.mxu0 %v597
    %610 = vmatprep.subr.bf16.mxu0 0
    %611 = vmatpush1.bf16.xpose.msra.mxu0 %v598
    %612 = vmatprep.subr.bf16.mxu0 0
    %613 = vmatpush1.bf16.xpose.msra.mxu0 %v599
    %614 = vmatprep.subr.bf16.mxu0 0
    %615 = vmatpush1.bf16.xpose.msra.mxu0 %v600
    %616 = vmatprep.subr.bf16.mxu0 0
    %617 = vmatpush1.bf16.xpose.msra.mxu0 %v601
    %618 = vmatprep.subr.bf16.mxu0 0
    %619 = vmatpush1.bf16.xpose.msra.mxu0 0
    %620 = vmatprep.subr.bf16.mxu0 0
    %621 = vmatpush1.bf16.xpose.msra.mxu0 0
    %622 = vmatprep.subr.bf16.mxu0 0
    %623 = vmatpush1.bf16.xpose.msra.mxu0 0
    %624 = vmatprep.subr.bf16.mxu0 0
    %625 = vmatpush1.bf16.xpose.msra.mxu0 0
    %626 = vmatprep.subr.bf16.mxu0 0
    %627 = vmatpush1.bf16.xpose.msra.mxu0 0
    %628 = vmatprep.subr.bf16.mxu0 0
    %629 = vmatpush1.bf16.xpose.msra.mxu0 0
    %630 = vmatprep.subr.bf16.mxu0 0
    %631 = vmatpush1.bf16.xpose.msra.mxu0 0
    %632 = vmatprep.subr.bf16.mxu0 0
    %633 = vmatpush1.bf16.xpose.msra.mxu0 0
    %634 = vmatprep.mubr.bf16.mxu0 0
    %635 = vmatmul.mubr.bf16.gmra.mrb[0].mxu0 %v593
    %v636 = vpop.f32.mrb[0].mxu0
    %v637 = vadd.f32 0.0, %v636
    %v638 = vpop.f32.mrb[0].mxu0
    %v639 = vpop.f32.mrb[0].mxu0
    %v640 = vadd.f32 0.0, %v639
    %v641 = vpop.f32.mrb[0].mxu0
    %642 = vdwg.mxu0
    %v643 = vadd.f32 %v637, %v46
    %v644 = vadd.f32 %v640, %v47
    %s645 = scalar_lea.vmem %s1, 32
    %v646 = vld [vmem:[%s645] sm:$0xff]
    %v647 = vld [vmem:[%s645 + $0x8] sm:$0xff]
    %v648 = vld [vmem:[%s645 + $0x10] sm:$0xff]
    %v649 = vld [vmem:[%s645 + $0x18] sm:$0xff]
    %v650 = vpack.c.bf16 %v647, %v646
    %v651 = vpack.c.bf16 %v649, %v648
    %v652 = vpack.c.bf16 %v644, %v643
    %s653 = scalar_lea.vmem %s2, 32
    %v654 = vld [vmem:[%s653] sm:$0xff]
    %v655 = vld [vmem:[%s653 + $0x8] sm:$0xff]
    %v656 = vld [vmem:[%s653 + $0x10] sm:$0xff]
    %v657 = vld [vmem:[%s653 + $0x18] sm:$0xff]
    %659 = vset.pattern.permute.xlu0 0
    %660 = vperm.xlu0 %659, %v654
    %v661 = vpop.permute.xlu0 %660
    %664 = vset.pattern.permute.xlu0 0
    %665 = vperm.xlu0 %664, %v655
    %v666 = vpop.permute.xlu0 %665
    %669 = vset.pattern.permute.xlu0 0
    %670 = vperm.xlu0 %669, %v656
    %v671 = vpop.permute.xlu0 %670
    %674 = vset.pattern.permute.xlu0 0
    %675 = vperm.xlu0 %674, %v657
    %v676 = vpop.permute.xlu0 %675
    %v679 = vsel %vm79, %v650, 0
    %v682 = vsel %vm79, %v651, 0
    %684 = vmatprep.subr.bf16.mxu0 0
    %685 = vmatpush1.bf16.msra.mxu0 %v652
    %686 = vmatprep.subr.bf16.mxu0 0
    %687 = vmatpush1.bf16.msra.mxu0 0
    %688 = vmatprep.subr.bf16.mxu0 0
    %689 = vmatpush1.bf16.msra.mxu0 0
    %690 = vmatprep.subr.bf16.mxu0 0
    %691 = vmatpush1.bf16.msra.mxu0 0
    %692 = vmatprep.subr.bf16.mxu0 0
    %693 = vmatpush1.bf16.msra.mxu0 0
    %694 = vmatprep.subr.bf16.mxu0 0
    %695 = vmatpush1.bf16.msra.mxu0 0
    %696 = vmatprep.subr.bf16.mxu0 0
    %697 = vmatpush1.bf16.msra.mxu0 0
    %698 = vmatprep.subr.bf16.mxu0 0
    %699 = vmatpush1.bf16.msra.mxu0 0
    %700 = vmatprep.subr.bf16.mxu0 0
    %701 = vmatpush1.bf16.msra.mxu0 0
    %702 = vmatprep.subr.bf16.mxu0 0
    %703 = vmatpush1.bf16.msra.mxu0 0
    %704 = vmatprep.subr.bf16.mxu0 0
    %705 = vmatpush1.bf16.msra.mxu0 0
    %706 = vmatprep.subr.bf16.mxu0 0
    %707 = vmatpush1.bf16.msra.mxu0 0
    %708 = vmatprep.subr.bf16.mxu0 0
    %709 = vmatpush1.bf16.msra.mxu0 0
    %710 = vmatprep.subr.bf16.mxu0 0
    %711 = vmatpush1.bf16.msra.mxu0 0
    %712 = vmatprep.subr.bf16.mxu0 0
    %713 = vmatpush1.bf16.msra.mxu0 0
    %714 = vmatprep.subr.bf16.mxu0 0
    %715 = vmatpush1.bf16.msra.mxu0 0
    %716 = vmatprep.mubr.bf16.mxu0 0
    %717 = vmatmul.mubr.bf16.gmra.mrb[0].mxu0 %v679
    %v718 = vpop.f32.mrb[0].mxu0
    %v719 = vadd.f32 %v661, %v718
    %v720 = vpop.f32.mrb[0].mxu0
    %v721 = vpop.f32.mrb[0].mxu0
    %v722 = vadd.f32 %v666, %v721
    %v723 = vpop.f32.mrb[0].mxu0
    %724 = vmatprep.mubr.bf16.mxu0 0
    %725 = vmatmul.mubr.bf16.gmra.mrb[0].mxu0 %v682
    %v726 = vpop.f32.mrb[0].mxu0
    %v727 = vadd.f32 %v671, %v726
    %v728 = vpop.f32.mrb[0].mxu0
    %v729 = vpop.f32.mrb[0].mxu0
    %v730 = vadd.f32 %v676, %v729
    %v731 = vpop.f32.mrb[0].mxu0
    %732 = vdwg.mxu0
    %733 = vrot.lane.b32.xlu0 %v719, 18
    %v734 = vpop.permute.xlu0 %733
    %s735 = scalar_lea.vmem %s3, 200
    %v736 = vld [vmem:[%s735] sm:$0xff]
    %v737 = vmul.f32 %v736, %v734
    %v738 = vadd.f32 %v737, 0.0
    %739 = vrot.lane.b32.xlu0 %v719, 17
    %v740 = vpop.permute.xlu0 %739
    %s741 = scalar_lea.vmem %s3, 208
    %v742 = vld [vmem:[%s741] sm:$0xff]
    %v743 = vmul.f32 %v742, %v740
    %v744 = vadd.f32 %v738, %v743
    %745 = vrot.lane.b32.xlu0 %v719, 16
    %v746 = vpop.permute.xlu0 %745
    %s747 = scalar_lea.vmem %s3, 216
    %v748 = vld [vmem:[%s747] sm:$0xff]
    %v749 = vmul.f32 %v748, %v746
    %v750 = vadd.f32 %v744, %v749
    %751 = vrot.lane.b32.xlu0 %v719, 15
    %v752 = vpop.permute.xlu0 %751
    %s753 = scalar_lea.vmem %s3, 224
    %v754 = vld [vmem:[%s753] sm:$0xff]
    %v755 = vmul.f32 %v754, %v752
    %v756 = vadd.f32 %v750, %v755
    %757 = vrot.lane.b32.xlu0 %v719, 14
    %v758 = vpop.permute.xlu0 %757
    %s759 = scalar_lea.vmem %s3, 232
    %v760 = vld [vmem:[%s759] sm:$0xff]
    %v761 = vmul.f32 %v760, %v758
    %v762 = vadd.f32 %v756, %v761
    %763 = vrot.lane.b32.xlu0 %v719, 10
    %v764 = vpop.permute.xlu0 %763
    %s765 = scalar_lea.vmem %s3, 240
    %v766 = vld [vmem:[%s765] sm:$0xff]
    %v767 = vmul.f32 %v766, %v764
    %v768 = vadd.f32 %v762, %v767
    %769 = vrot.lane.b32.xlu0 %v719, 9
    %v770 = vpop.permute.xlu0 %769
    %s771 = scalar_lea.vmem %s3, 248
    %v772 = vld [vmem:[%s771] sm:$0xff]
    %v773 = vmul.f32 %v772, %v770
    %v774 = vadd.f32 %v768, %v773
    %775 = vrot.lane.b32.xlu0 %v719, 8
    %v776 = vpop.permute.xlu0 %775
    %s777 = scalar_lea.vmem %s3, 256
    %v778 = vld [vmem:[%s777] sm:$0xff]
    %v779 = vmul.f32 %v778, %v776
    %v780 = vadd.f32 %v774, %v779
    %781 = vrot.lane.b32.xlu0 %v719, 7
    %v782 = vpop.permute.xlu0 %781
    %s783 = scalar_lea.vmem %s3, 264
    %v784 = vld [vmem:[%s783] sm:$0xff]
    %v785 = vmul.f32 %v784, %v782
    %v786 = vadd.f32 %v780, %v785
    %787 = vrot.lane.b32.xlu0 %v719, 6
    %v788 = vpop.permute.xlu0 %787
    %s789 = scalar_lea.vmem %s3, 272
    %v790 = vld [vmem:[%s789] sm:$0xff]
    %v791 = vmul.f32 %v790, %v788
    %v792 = vadd.f32 %v786, %v791
    %793 = vrot.lane.b32.xlu0 %v719, 2
    %v794 = vpop.permute.xlu0 %793
    %s795 = scalar_lea.vmem %s3, 280
    %v796 = vld [vmem:[%s795] sm:$0xff]
    %v797 = vmul.f32 %v796, %v794
    %v798 = vadd.f32 %v792, %v797
    %799 = vrot.lane.b32.xlu0 %v719, 1
    %v800 = vpop.permute.xlu0 %799
    %s801 = scalar_lea.vmem %s3, 288
    %v802 = vld [vmem:[%s801] sm:$0xff]
    %v803 = vmul.f32 %v802, %v800
    %v804 = vadd.f32 %v798, %v803
    %s805 = scalar_lea.vmem %s3, 296
    %v806 = vld [vmem:[%s805] sm:$0xff]
    %v807 = vmul.f32 %v806, %v719
    %v808 = vadd.f32 %v804, %v807
    %809 = vrot.lane.b32.xlu0 %v719, 127
    %v810 = vpop.permute.xlu0 %809
    %s811 = scalar_lea.vmem %s3, 304
    %v812 = vld [vmem:[%s811] sm:$0xff]
    %v813 = vmul.f32 %v812, %v810
    %v814 = vadd.f32 %v808, %v813
    %815 = vrot.lane.b32.xlu0 %v719, 126
    %v816 = vpop.permute.xlu0 %815
    %s817 = scalar_lea.vmem %s3, 312
    %v818 = vld [vmem:[%s817] sm:$0xff]
    %v819 = vmul.f32 %v818, %v816
    %v820 = vadd.f32 %v814, %v819
    %821 = vrot.lane.b32.xlu0 %v719, 122
    %v822 = vpop.permute.xlu0 %821
    %s823 = scalar_lea.vmem %s3, 320
    %v824 = vld [vmem:[%s823] sm:$0xff]
    %v825 = vmul.f32 %v824, %v822
    %v826 = vadd.f32 %v820, %v825
    %827 = vrot.lane.b32.xlu0 %v719, 121
    %v828 = vpop.permute.xlu0 %827
    %s829 = scalar_lea.vmem %s3, 328
    %v830 = vld [vmem:[%s829] sm:$0xff]
    %v831 = vmul.f32 %v830, %v828
    %v832 = vadd.f32 %v826, %v831
    %833 = vrot.lane.b32.xlu0 %v719, 120
    %v834 = vpop.permute.xlu0 %833
    %s835 = scalar_lea.vmem %s3, 336
    %v836 = vld [vmem:[%s835] sm:$0xff]
    %v837 = vmul.f32 %v836, %v834
    %v838 = vadd.f32 %v832, %v837
    %839 = vrot.lane.b32.xlu0 %v719, 119
    %v840 = vpop.permute.xlu0 %839
    %s841 = scalar_lea.vmem %s3, 344
    %v842 = vld [vmem:[%s841] sm:$0xff]
    %v843 = vmul.f32 %v842, %v840
    %v844 = vadd.f32 %v838, %v843
    %845 = vrot.lane.b32.xlu0 %v719, 118
    %v846 = vpop.permute.xlu0 %845
    %s847 = scalar_lea.vmem %s3, 352
    %v848 = vld [vmem:[%s847] sm:$0xff]
    %v849 = vmul.f32 %v848, %v846
    %v850 = vadd.f32 %v844, %v849
    %851 = vrot.lane.b32.xlu0 %v719, 114
    %v852 = vpop.permute.xlu0 %851
    %s853 = scalar_lea.vmem %s3, 360
    %v854 = vld [vmem:[%s853] sm:$0xff]
    %v855 = vmul.f32 %v854, %v852
    %v856 = vadd.f32 %v850, %v855
    %857 = vrot.lane.b32.xlu0 %v719, 113
    %v858 = vpop.permute.xlu0 %857
    %s859 = scalar_lea.vmem %s3, 368
    %v860 = vld [vmem:[%s859] sm:$0xff]
    %v861 = vmul.f32 %v860, %v858
    %v862 = vadd.f32 %v856, %v861
    %863 = vrot.lane.b32.xlu0 %v719, 112
    %v864 = vpop.permute.xlu0 %863
    %s865 = scalar_lea.vmem %s3, 376
    %v866 = vld [vmem:[%s865] sm:$0xff]
    %v867 = vmul.f32 %v866, %v864
    %v868 = vadd.f32 %v862, %v867
    %869 = vrot.lane.b32.xlu0 %v719, 111
    %v870 = vpop.permute.xlu0 %869
    %s871 = scalar_lea.vmem %s3, 384
    %v872 = vld [vmem:[%s871] sm:$0xff]
    %v873 = vmul.f32 %v872, %v870
    %v874 = vadd.f32 %v868, %v873
    %875 = vrot.lane.b32.xlu0 %v719, 110
    %v876 = vpop.permute.xlu0 %875
    %s877 = scalar_lea.vmem %s3, 392
    %v878 = vld [vmem:[%s877] sm:$0xff]
    %v879 = vmul.f32 %v878, %v876
    %v880 = vadd.f32 %v874, %v879
    %s881 = scalar_lea.vmem %s4, 8
    %v882 = vld [vmem:[%s881] sm:$0xff]
    %884 = vset.pattern.permute.xlu0 0
    %885 = vperm.xlu0 %884, %v882
    %v886 = vpop.permute.xlu0 %885
    %v888 = vadd.f32 %v880, %v886
    %v889 = vpack.c.bf16 %v888, %v888
    %v890 = vpack.c.bf16 %v722, %v722
    %s891 = scalar_lea.vmem [#allocation2], 128
    %v892 = vld [vmem:[%s891] sm:$0xff]
    %v893 = vld [vmem:[%s891 + $0x8] sm:$0xff]
    %v894 = vld [vmem:[%s891 + $0x10] sm:$0xff]
    %v895 = vld [vmem:[%s891 + $0x18] sm:$0xff]
    %v896 = vld [vmem:[%s891 + $0x20] sm:$0xff]
    %v897 = vld [vmem:[%s891 + $0x28] sm:$0xff]
    %v898 = vld [vmem:[%s891 + $0x30] sm:$0xff]
    %v899 = vld [vmem:[%s891 + $0x38] sm:$0xff]
    %v900 = vld [vmem:[%s891 + $0x40] sm:$0xff]
    %v901 = vld [vmem:[%s891 + $0x48] sm:$0xff]
    %v902 = vld [vmem:[%s891 + $0x50] sm:$0xff]
    %v903 = vld [vmem:[%s891 + $0x58] sm:$0xff]
    %v904 = vld [vmem:[%s891 + $0x60] sm:$0xff]
    %v905 = vld [vmem:[%s891 + $0x68] sm:$0xff]
    %v906 = vld [vmem:[%s891 + $0x70] sm:$0xff]
    %v907 = vld [vmem:[%s891 + $0x78] sm:$0xff]
    %908 = vxpose.xlu0.c.b16.start [1/8] %v889, 128
    %909 = vxpose.xlu0.c.b16.cont [2/8] 0, 128
    %910 = vxpose.xlu0.c.b16.cont [3/8] 0, 128
    %911 = vxpose.xlu0.c.b16.cont [4/8] 0, 128
    %912 = vxpose.xlu0.c.b16.cont [5/8] 0, 128
    %913 = vxpose.xlu0.c.b16.cont [6/8] 0, 128
    %914 = vxpose.xlu0.c.b16.cont [7/8] 0, 128
    %915 = vxpose.xlu0.c.b16.end [8/8] 0, 128
    %v916 = vpop.trf.xlu0
    %v917 = vpop.trf.xlu0
    %v918 = vpop.trf.xlu0
    %v919 = vpop.trf.xlu0
    %v920 = vpop.trf.xlu0
    %v921 = vpop.trf.xlu0
    %v922 = vpop.trf.xlu0
    %v923 = vpop.trf.xlu0
    %v925 = vsel %vm323, %v916, 0
    %v928 = vsel %vm323, %v917, 0
    %v931 = vsel %vm323, %v918, 0
    %v934 = vsel %vm323, %v919, 0
    %v937 = vsel %vm323, %v920, 0
    %v940 = vsel %vm323, %v921, 0
    %v943 = vsel %vm323, %v922, 0
    %v946 = vsel %vm323, %v923, 0
    %v949 = vsel %vm348, %v890, 0
    %951 = vmatprep.subr.bf16.mxu0 0
    %952 = vmatpush1.bf16.msra.mxu0 %v949
    %953 = vmatprep.subr.bf16.mxu0 0
    %954 = vmatpush1.bf16.msra.mxu0 0
    %955 = vmatprep.subr.bf16.mxu0 0
    %956 = vmatpush1.bf16.msra.mxu0 0
    %957 = vmatprep.subr.bf16.mxu0 0
    %958 = vmatpush1.bf16.msra.mxu0 0
    %959 = vmatprep.subr.bf16.mxu0 0
    %960 = vmatpush1.bf16.msra.mxu0 0
    %961 = vmatprep.subr.bf16.mxu0 0
    %962 = vmatpush1.bf16.msra.mxu0 0
    %963 = vmatprep.subr.bf16.mxu0 0
    %964 = vmatpush1.bf16.msra.mxu0 0
    %965 = vmatprep.subr.bf16.mxu0 0
    %966 = vmatpush1.bf16.msra.mxu0 0
    %967 = vmatprep.subr.bf16.mxu0 0
    %968 = vmatpush1.bf16.msra.mxu0 0
    %969 = vmatprep.subr.bf16.mxu0 0
    %970 = vmatpush1.bf16.msra.mxu0 0
    %971 = vmatprep.subr.bf16.mxu0 0
    %972 = vmatpush1.bf16.msra.mxu0 0
    %973 = vmatprep.subr.bf16.mxu0 0
    %974 = vmatpush1.bf16.msra.mxu0 0
    %975 = vmatprep.subr.bf16.mxu0 0
    %976 = vmatpush1.bf16.msra.mxu0 0
    %977 = vmatprep.subr.bf16.mxu0 0
    %978 = vmatpush1.bf16.msra.mxu0 0
    %979 = vmatprep.subr.bf16.mxu0 0
    %980 = vmatpush1.bf16.msra.mxu0 0
    %981 = vmatprep.subr.bf16.mxu0 0
    %982 = vmatpush1.bf16.msra.mxu0 0
    %983 = vmatprep.mubr.bf16.mxu0 0
    %984 = vmatmul.mubr.bf16.gmra.mrb[0].mxu0 %v925
    %v985 = vpop.f32.mrb[0].mxu0
    %v986 = vadd.f32 %v892, %v985
    %v987 = vpop.f32.mrb[0].mxu0
    %v988 = vpop.f32.mrb[0].mxu0
    %v989 = vadd.f32 %v893, %v988
    %v990 = vpop.f32.mrb[0].mxu0
    %991 = vmatprep.mubr.bf16.mxu0 0
    %992 = vmatmul.mubr.bf16.gmra.mrb[0].mxu0 %v928
    %v993 = vpop.f32.mrb[0].mxu0
    %v994 = vadd.f32 %v894, %v993
    %v995 = vpop.f32.mrb[0].mxu0
    %v996 = vpop.f32.mrb[0].mxu0
    %v997 = vadd.f32 %v895, %v996
    %v998 = vpop.f32.mrb[0].mxu0
    %999 = vmatprep.mubr.bf16.mxu0 0
    %1000 = vmatmul.mubr.bf16.gmra.mrb[0].mxu0 %v931
    %v1001 = vpop.f32.mrb[0].mxu0
    %v1002 = vadd.f32 %v896, %v1001
    %v1003 = vpop.f32.mrb[0].mxu0
    %v1004 = vpop.f32.mrb[0].mxu0
    %v1005 = vadd.f32 %v897, %v1004
    %v1006 = vpop.f32.mrb[0].mxu0
    %1007 = vmatprep.mubr.bf16.mxu0 0
    %1008 = vmatmul.mubr.bf16.gmra.mrb[0].mxu0 %v934
    %v1009 = vpop.f32.mrb[0].mxu0
    %v1010 = vadd.f32 %v898, %v1009
    %v1011 = vpop.f32.mrb[0].mxu0
    %v1012 = vpop.f32.mrb[0].mxu0
    %v1013 = vadd.f32 %v899, %v1012
    %v1014 = vpop.f32.mrb[0].mxu0
    %1015 = vmatprep.mubr.bf16.mxu0 0
    %1016 = vmatmul.mubr.bf16.gmra.mrb[0].mxu0 %v937
    %v1017 = vpop.f32.mrb[0].mxu0
    %v1018 = vadd.f32 %v900, %v1017
    %v1019 = vpop.f32.mrb[0].mxu0
    %v1020 = vpop.f32.mrb[0].mxu0
    %v1021 = vadd.f32 %v901, %v1020
    %v1022 = vpop.f32.mrb[0].mxu0
    %1023 = vmatprep.mubr.bf16.mxu0 0
    %1024 = vmatmul.mubr.bf16.gmra.mrb[0].mxu0 %v940
    %v1025 = vpop.f32.mrb[0].mxu0
    %v1026 = vadd.f32 %v902, %v1025
    %v1027 = vpop.f32.mrb[0].mxu0
    %v1028 = vpop.f32.mrb[0].mxu0
    %v1029 = vadd.f32 %v903, %v1028
    %v1030 = vpop.f32.mrb[0].mxu0
    %1031 = vmatprep.mubr.bf16.mxu0 0
    %1032 = vmatmul.mubr.bf16.gmra.mrb[0].mxu0 %v943
    %v1033 = vpop.f32.mrb[0].mxu0
    %v1034 = vadd.f32 %v904, %v1033
    %v1035 = vpop.f32.mrb[0].mxu0
    %v1036 = vpop.f32.mrb[0].mxu0
    %v1037 = vadd.f32 %v905, %v1036
    %v1038 = vpop.f32.mrb[0].mxu0
    %1039 = vmatprep.mubr.bf16.mxu0 0
    %1040 = vmatmul.mubr.bf16.gmra.mrb[0].mxu0 %v946
    %v1041 = vpop.f32.mrb[0].mxu0
    %v1042 = vadd.f32 %v906, %v1041
    %v1043 = vpop.f32.mrb[0].mxu0
    %v1044 = vpop.f32.mrb[0].mxu0
    %v1045 = vadd.f32 %v907, %v1044
    %v1046 = vpop.f32.mrb[0].mxu0
    %1047 = vdwg.mxu0
    %1048 = vmax.xlane.f32.xlu0 %v986
    %v1049 = vpop.xlane.xlu0 %1048
    %1050 = vmax.xlane.f32.xlu0 %v989
    %v1051 = vpop.xlane.xlu0 %1050
    %1052 = vmax.xlane.f32.xlu0 %v994
    %v1053 = vpop.xlane.xlu0 %1052
    %1054 = vmax.xlane.f32.xlu0 %v997
    %v1055 = vpop.xlane.xlu0 %1054
    %1056 = vmax.xlane.f32.xlu0 %v1002
    %v1057 = vpop.xlane.xlu0 %1056
    %1058 = vmax.xlane.f32.xlu0 %v1005
    %v1059 = vpop.xlane.xlu0 %1058
    %1060 = vmax.xlane.f32.xlu0 %v1010
    %v1061 = vpop.xlane.xlu0 %1060
    %1062 = vmax.xlane.f32.xlu0 %v1013
    %v1063 = vpop.xlane.xlu0 %1062
    %1064 = vmax.xlane.f32.xlu0 %v1018
    %v1065 = vpop.xlane.xlu0 %1064
    %1066 = vmax.xlane.f32.xlu0 %v1021
    %v1067 = vpop.xlane.xlu0 %1066
    %1068 = vmax.xlane.f32.xlu0 %v1026
    %v1069 = vpop.xlane.xlu0 %1068
    %1070 = vmax.xlane.f32.xlu0 %v1029
    %v1071 = vpop.xlane.xlu0 %1070
    %1072 = vmax.xlane.f32.xlu0 %v1034
    %v1073 = vpop.xlane.xlu0 %1072
    %1074 = vmax.xlane.f32.xlu0 %v1037
    %v1075 = vpop.xlane.xlu0 %1074
    %1076 = vmax.xlane.f32.xlu0 %v1042
    %v1077 = vpop.xlane.xlu0 %1076
    %1078 = vmax.xlane.f32.xlu0 %v1045
    %v1079 = vpop.xlane.xlu0 %1078
    %v1080 = vsub.f32 %v986, %v1049
    %v1081 = vsub.f32 %v989, %v1051
    %v1082 = vsub.f32 %v994, %v1053
    %v1083 = vsub.f32 %v997, %v1055
    %v1084 = vsub.f32 %v1002, %v1057
    %v1085 = vsub.f32 %v1005, %v1059
    %v1086 = vsub.f32 %v1010, %v1061
    %v1087 = vsub.f32 %v1013, %v1063
    %v1088 = vsub.f32 %v1018, %v1065
    %v1089 = vsub.f32 %v1021, %v1067
    %v1090 = vsub.f32 %v1026, %v1069
    %v1091 = vsub.f32 %v1029, %v1071
    %v1092 = vsub.f32 %v1034, %v1073
    %v1093 = vsub.f32 %v1037, %v1075
    %v1094 = vsub.f32 %v1042, %v1077
    %v1095 = vsub.f32 %v1045, %v1079
    %v1096 = vmul.f32 %v1080, 1.442695
    %v1097 = vpow.pop %v1096
    %v1098 = vmul.f32 %v1081, 1.442695
    %v1099 = vpow.pop %v1098
    %v1100 = vmul.f32 %v1082, 1.442695
    %v1101 = vpow.pop %v1100
    %v1102 = vmul.f32 %v1083, 1.442695
    %v1103 = vpow.pop %v1102
    %v1104 = vmul.f32 %v1084, 1.442695
    %v1105 = vpow.pop %v1104
    %v1106 = vmul.f32 %v1085, 1.442695
    %v1107 = vpow.pop %v1106
    %v1108 = vmul.f32 %v1086, 1.442695
    %v1109 = vpow.pop %v1108
    %v1110 = vmul.f32 %v1087, 1.442695
    %v1111 = vpow.pop %v1110
    %v1112 = vmul.f32 %v1088, 1.442695
    %v1113 = vpow.pop %v1112
    %v1114 = vmul.f32 %v1089, 1.442695
    %v1115 = vpow.pop %v1114
    %v1116 = vmul.f32 %v1090, 1.442695
    %v1117 = vpow.pop %v1116
    %v1118 = vmul.f32 %v1091, 1.442695
    %v1119 = vpow.pop %v1118
    %v1120 = vmul.f32 %v1092, 1.442695
    %v1121 = vpow.pop %v1120
    %v1122 = vmul.f32 %v1093, 1.442695
    %v1123 = vpow.pop %v1122
    %v1124 = vmul.f32 %v1094, 1.442695
    %v1125 = vpow.pop %v1124
    %v1126 = vmul.f32 %v1095, 1.442695
    %v1127 = vpow.pop %v1126
    %1128 = vadd.xlane.f32.xlu0 %v1097
    %v1129 = vpop.xlane.xlu0 %1128
    %1130 = vadd.xlane.f32.xlu0 %v1099
    %v1131 = vpop.xlane.xlu0 %1130
    %1132 = vadd.xlane.f32.xlu0 %v1101
    %v1133 = vpop.xlane.xlu0 %1132
    %1134 = vadd.xlane.f32.xlu0 %v1103
    %v1135 = vpop.xlane.xlu0 %1134
    %1136 = vadd.xlane.f32.xlu0 %v1105
    %v1137 = vpop.xlane.xlu0 %1136
    %1138 = vadd.xlane.f32.xlu0 %v1107
    %v1139 = vpop.xlane.xlu0 %1138
    %1140 = vadd.xlane.f32.xlu0 %v1109
    %v1141 = vpop.xlane.xlu0 %1140
    %1142 = vadd.xlane.f32.xlu0 %v1111
    %v1143 = vpop.xlane.xlu0 %1142
    %1144 = vadd.xlane.f32.xlu0 %v1113
    %v1145 = vpop.xlane.xlu0 %1144
    %1146 = vadd.xlane.f32.xlu0 %v1115
    %v1147 = vpop.xlane.xlu0 %1146
    %1148 = vadd.xlane.f32.xlu0 %v1117
    %v1149 = vpop.xlane.xlu0 %1148
    %1150 = vadd.xlane.f32.xlu0 %v1119
    %v1151 = vpop.xlane.xlu0 %1150
    %1152 = vadd.xlane.f32.xlu0 %v1121
    %v1153 = vpop.xlane.xlu0 %1152
    %1154 = vadd.xlane.f32.xlu0 %v1123
    %v1155 = vpop.xlane.xlu0 %1154
    %1156 = vadd.xlane.f32.xlu0 %v1125
    %v1157 = vpop.xlane.xlu0 %1156
    %1158 = vadd.xlane.f32.xlu0 %v1127
    %v1159 = vpop.xlane.xlu0 %1158
    %v1160 = vrcp.pop %v1129
    %v1161 = vrcp.pop %v1131
    %v1162 = vrcp.pop %v1133
    %v1163 = vrcp.pop %v1135
    %v1164 = vrcp.pop %v1137
    %v1165 = vrcp.pop %v1139
    %v1166 = vrcp.pop %v1141
    %v1167 = vrcp.pop %v1143
    %v1168 = vrcp.pop %v1145
    %v1169 = vrcp.pop %v1147
    %v1170 = vrcp.pop %v1149
    %v1171 = vrcp.pop %v1151
    %v1172 = vrcp.pop %v1153
    %v1173 = vrcp.pop %v1155
    %v1174 = vrcp.pop %v1157
    %v1175 = vrcp.pop %v1159
    %v1176 = vmul.f32 %v1097, %v1160
    %v1177 = vmul.f32 %v1099, %v1161
    %v1178 = vmul.f32 %v1101, %v1162
    %v1179 = vmul.f32 %v1103, %v1163
    %v1180 = vmul.f32 %v1105, %v1164
    %v1181 = vmul.f32 %v1107, %v1165
    %v1182 = vmul.f32 %v1109, %v1166
    %v1183 = vmul.f32 %v1111, %v1167
    %v1184 = vmul.f32 %v1113, %v1168
    %v1185 = vmul.f32 %v1115, %v1169
    %v1186 = vmul.f32 %v1117, %v1170
    %v1187 = vmul.f32 %v1119, %v1171
    %v1188 = vmul.f32 %v1121, %v1172
    %v1189 = vmul.f32 %v1123, %v1173
    %v1190 = vmul.f32 %v1125, %v1174
    %v1191 = vmul.f32 %v1127, %v1175
    %v1192 = vpack.c.bf16 %v730, %v727
    %v1193 = vpack.c.bf16 %v1177, %v1176
    %v1194 = vpack.c.bf16 %v1179, %v1178
    %v1195 = vpack.c.bf16 %v1181, %v1180
    %v1196 = vpack.c.bf16 %v1183, %v1182
    %v1197 = vpack.c.bf16 %v1185, %v1184
    %v1198 = vpack.c.bf16 %v1187, %v1186
    %v1199 = vpack.c.bf16 %v1189, %v1188
    %v1200 = vpack.c.bf16 %v1191, %v1190
    %1201 = vmatprep.subr.bf16.mxu0 0
    %1202 = vmatpush1.bf16.xpose.msra.mxu0 %v1193
    %1203 = vmatprep.subr.bf16.mxu0 0
    %1204 = vmatpush1.bf16.xpose.msra.mxu0 %v1194
    %1205 = vmatprep.subr.bf16.mxu0 0
    %1206 = vmatpush1.bf16.xpose.msra.mxu0 %v1195
    %1207 = vmatprep.subr.bf16.mxu0 0
    %1208 = vmatpush1.bf16.xpose.msra.mxu0 %v1196
    %1209 = vmatprep.subr.bf16.mxu0 0
    %1210 = vmatpush1.bf16.xpose.msra.mxu0 %v1197
    %1211 = vmatprep.subr.bf16.mxu0 0
    %1212 = vmatpush1.bf16.xpose.msra.mxu0 %v1198
    %1213 = vmatprep.subr.bf16.mxu0 0
    %1214 = vmatpush1.bf16.xpose.msra.mxu0 %v1199
    %1215 = vmatprep.subr.bf16.mxu0 0
    %1216 = vmatpush1.bf16.xpose.msra.mxu0 %v1200
    %1217 = vmatprep.subr.bf16.mxu0 0
    %1218 = vmatpush1.bf16.xpose.msra.mxu0 0
    %1219 = vmatprep.subr.bf16.mxu0 0
    %1220 = vmatpush1.bf16.xpose.msra.mxu0 0
    %1221 = vmatprep.subr.bf16.mxu0 0
    %1222 = vmatpush1.bf16.xpose.msra.mxu0 0
    %1223 = vmatprep.subr.bf16.mxu0 0
    %1224 = vmatpush1.bf16.xpose.msra.mxu0 0
    %1225 = vmatprep.subr.bf16.mxu0 0
    %1226 = vmatpush1.bf16.xpose.msra.mxu0 0
    %1227 = vmatprep.subr.bf16.mxu0 0
    %1228 = vmatpush1.bf16.xpose.msra.mxu0 0
    %1229 = vmatprep.subr.bf16.mxu0 0
    %1230 = vmatpush1.bf16.xpose.msra.mxu0 0
    %1231 = vmatprep.subr.bf16.mxu0 0
    %1232 = vmatpush1.bf16.xpose.msra.mxu0 0
    %1233 = vmatprep.mubr.bf16.mxu0 0
    %1234 = vmatmul.mubr.bf16.gmra.mrb[0].mxu0 %v1192
    %v1235 = vpop.f32.mrb[0].mxu0
    %v1236 = vadd.f32 0.0, %v1235
    %v1237 = vpop.f32.mrb[0].mxu0
    %v1238 = vpop.f32.mrb[0].mxu0
    %v1239 = vadd.f32 0.0, %v1238
    %v1240 = vpop.f32.mrb[0].mxu0
    %1241 = vdwg.mxu0
    %v1242 = vmax.f32 %v637, 0.0
    %v1243 = vmax.f32 %v640, 0.0
    %v1244 = vmax.f32 %v1236, 0.0
    %v1245 = vmax.f32 %v1239, 0.0
    %v1246 = vld [vmem:[%s6] sm:$0xff]
    %v1247 = vld [vmem:[%s6 + $0x8] sm:$0xff]
    %v1248 = vld [vmem:[%s6 + $0x10] sm:$0xff]
    %v1249 = vld [vmem:[%s6 + $0x18] sm:$0xff]
    %v1250 = vpack.c.bf16 %v1247, %v1246
    %v1251 = vpack.c.bf16 %v1249, %v1248
    %v1252 = vpack.c.bf16 %v1243, %v1242
    %v1253 = vpack.c.bf16 %v1245, %v1244
    %v1254 = vld [vmem:[%s7] sm:$0xff]
    %v1255 = vld [vmem:[%s7 + $0x8] sm:$0xff]
    %v1256 = vld [vmem:[%s7 + $0x10] sm:$0xff]
    %v1257 = vld [vmem:[%s7 + $0x18] sm:$0xff]
    %1259 = vset.pattern.permute.xlu0 0
    %1260 = vperm.xlu0 %1259, %v1254
    %v1261 = vpop.permute.xlu0 %1260
    %1264 = vset.pattern.permute.xlu0 0
    %1265 = vperm.xlu0 %1264, %v1255
    %v1266 = vpop.permute.xlu0 %1265
    %1269 = vset.pattern.permute.xlu0 0
    %1270 = vperm.xlu0 %1269, %v1256
    %v1271 = vpop.permute.xlu0 %1270
    %1274 = vset.pattern.permute.xlu0 0
    %1275 = vperm.xlu0 %1274, %v1257
    %v1276 = vpop.permute.xlu0 %1275
    %vm1278 = vcmask 261120
    %v1280 = vsel %vm1278, %v1250, 0
    %v1283 = vsel %vm1278, %v1251, 0
    %1285 = vmatprep.subr.bf16.mxu0 0
    %1286 = vmatpush1.bf16.msra.mxu0 %v1252
    %1287 = vmatprep.subr.bf16.mxu0 0
    %1288 = vmatpush1.bf16.msra.mxu0 %v1253
    %1289 = vmatprep.subr.bf16.mxu0 0
    %1290 = vmatpush1.bf16.msra.mxu0 0
    %1291 = vmatprep.subr.bf16.mxu0 0
    %1292 = vmatpush1.bf16.msra.mxu0 0
    %1293 = vmatprep.subr.bf16.mxu0 0
    %1294 = vmatpush1.bf16.msra.mxu0 0
    %1295 = vmatprep.subr.bf16.mxu0 0
    %1296 = vmatpush1.bf16.msra.mxu0 0
    %1297 = vmatprep.subr.bf16.mxu0 0
    %1298 = vmatpush1.bf16.msra.mxu0 0
    %1299 = vmatprep.subr.bf16.mxu0 0
    %1300 = vmatpush1.bf16.msra.mxu0 0
    %1301 = vmatprep.subr.bf16.mxu0 0
    %1302 = vmatpush1.bf16.msra.mxu0 0
    %1303 = vmatprep.subr.bf16.mxu0 0
    %1304 = vmatpush1.bf16.msra.mxu0 0
    %1305 = vmatprep.subr.bf16.mxu0 0
    %1306 = vmatpush1.bf16.msra.mxu0 0
    %1307 = vmatprep.subr.bf16.mxu0 0
    %1308 = vmatpush1.bf16.msra.mxu0 0
    %1309 = vmatprep.subr.bf16.mxu0 0
    %1310 = vmatpush1.bf16.msra.mxu0 0
    %1311 = vmatprep.subr.bf16.mxu0 0
    %1312 = vmatpush1.bf16.msra.mxu0 0
    %1313 = vmatprep.subr.bf16.mxu0 0
    %1314 = vmatpush1.bf16.msra.mxu0 0
    %1315 = vmatprep.subr.bf16.mxu0 0
    %1316 = vmatpush1.bf16.msra.mxu0 0
    %1317 = vmatprep.mubr.bf16.mxu0 0
    %1318 = vmatmul.mubr.bf16.gmra.mrb[0].mxu0 %v1280
    %v1319 = vpop.f32.mrb[0].mxu0
    %v1320 = vadd.f32 %v1261, %v1319
    %v1321 = vpop.f32.mrb[0].mxu0
    %v1322 = vpop.f32.mrb[0].mxu0
    %v1323 = vadd.f32 %v1266, %v1322
    %v1324 = vpop.f32.mrb[0].mxu0
    %1325 = vmatprep.mubr.bf16.mxu0 0
    %1326 = vmatmul.mubr.bf16.gmra.mrb[0].mxu0 %v1283
    %v1327 = vpop.f32.mrb[0].mxu0
    %v1328 = vadd.f32 %v1271, %v1327
    %v1329 = vpop.f32.mrb[0].mxu0
    %v1330 = vpop.f32.mrb[0].mxu0
    %v1331 = vadd.f32 %v1276, %v1330
    %v1332 = vpop.f32.mrb[0].mxu0
    %1333 = vdwg.mxu0
    %1334 = vst [vmem:[%s8] sm:$0xff] %v1320
    %1335 = vst [vmem:[%s8 + $0x8] sm:$0xff] %v1323
    %1336 = vst [vmem:[%s8 + $0x10] sm:$0xff] %v1328
    %1337 = vst [vmem:[%s8 + $0x18] sm:$0xff] %v1331
    // Predicated region
    $region38: #{cascaded_group_attention.1} parent=1 // pred_check
      _
    $region39: #{cascaded_group_attention.1} parent=1 // pred_check_branch
      %1339 = sbr.rel (0) target = $region41
    $region40: #{cascaded_group_attention.1} parent=1 // pred_region
      _
    $region41: #{cascaded_group_attention.1} parent=1 // pred_fallthru
      _
    // Predicated region
    $region42: #{cascaded_group_attention.1} parent=1 // pred_check
      _
    $region43: #{cascaded_group_attention.1} parent=1 // pred_check_branch
      %1341 = sbr.rel (0) target = $region45
    $region44: #{cascaded_group_attention.1} parent=1 // pred_region
      _
    $region45: #{cascaded_group_attention.1} parent=1 // pred_fallthru
      _
    %1342 = vsyncpa [#allocation3], 1

</llo_original>
